<compile_context>
chip_gen: v7x
topology: tpu7x:2x2x1
jax: 0.10.0
libtpu: 0.0.40
codegen_flags: <defaults>
</compile_context>

<pallas_src>
import functools

import jax
import jax.numpy as jnp
from jax.experimental import pallas as pl
from jax.experimental.pallas import tpu as pltpu

_LANE = 128
_INV_SQRT2 = 0.7071067811865476


def _round_up(v, m):
    return ((v + m - 1) // m) * m


def _gelu_exact(x):
    # torch.nn.GELU() default: 0.5 * x * (1 + erf(x / sqrt(2)))
    return 0.5 * x * (1.0 + jax.lax.erf(x * _INV_SQRT2))


def gcn_kernel(xf_ref, bd_ref, pool_ref, w1_ref, b1_ref, w2_ref, b2_ref,
               w3_ref, b3_ref, w4_ref, b4_ref, out_ref):
    # xf_ref : (TB*N, Din) f32     node features, TB graphs stacked
    # bd_ref : (1, TB*N, TB*N) bf16 block-diagonal adjacency for these TB graphs
    x = xf_ref[...].astype(jnp.bfloat16)            # cast on VPU (idle slots)
    bd = bd_ref[0]                                  # (TB*N, TB*N) bf16

    # --- GraphConvolution, reordered: (adj @ x) @ W1 + b1 (associativity-exact) ---
    ax = jnp.dot(bd, x, preferred_element_type=jnp.float32)                 # (TB*N, Din)
    h = jnp.dot(ax.astype(jnp.bfloat16), w1_ref[...],
                preferred_element_type=jnp.float32) + b1_ref[...]           # (TB*N, H)

    # --- GELU (exact, erf-based) in f32 ---
    h = _gelu_exact(h)

    # --- Dropout: eval mode -> identity ---
    # TODO(synk): training-mode dropout (p=0.5) not implemented; forward uses eval semantics.

    # --- MLP: Linear -> ReLU -> Linear -> ReLU (bf16 MXU, f32 accum) ---
    h = jnp.dot(h.astype(jnp.bfloat16), w2_ref[...],
                preferred_element_type=jnp.float32) + b2_ref[...]
    h = jnp.maximum(h, 0.0)
    h = jnp.dot(h.astype(jnp.bfloat16), w3_ref[...],
                preferred_element_type=jnp.float32) + b3_ref[...]
    h = jnp.maximum(h, 0.0)                                                 # (TB*N, H3)

    # --- mean over nodes BEFORE the last Linear (mean commutes with affine map) ---
    pooled = jnp.dot(pool_ref[...], h.astype(jnp.bfloat16),
                     preferred_element_type=jnp.float32)                    # (TB, H3)

    # --- final Linear on pooled features; output block is lane-dense (TB, 128) ---
    out_ref[...] = (jnp.dot(pooled.astype(jnp.bfloat16), w4_ref[...],
                            preferred_element_type=jnp.float32)
                    + b4_ref[...]).astype(out_ref.dtype)


def prepare_gcn_params(params, *, n, tb):
    """One-time preparation (call once, outside the hot path): bf16 casts, output-dim
    padding to the 128-lane width, and the ones/N pooling matrix."""
    w1, b1, w2, b2, w3, b3, w4, b4 = params
    dout = w4.shape[1]
    dp = _round_up(dout, _LANE)
    w4p = jnp.pad(w4, ((0, 0), (0, dp - dout))).astype(jnp.bfloat16)
    b4p = jnp.pad(b4, ((0, 0), (0, dp - dout))).astype(jnp.float32)
    # Block "diagonal" ones/N pooling matrix: mean over nodes = one bf16 MXU matmul.
    pool = (jnp.repeat(jnp.eye(tb, dtype=jnp.float32), n, axis=1) / n).astype(jnp.bfloat16)
    return (w1.astype(jnp.bfloat16), b1.astype(jnp.float32),
            w2.astype(jnp.bfloat16), b2.astype(jnp.float32),
            w3.astype(jnp.bfloat16), b3.astype(jnp.float32),
            w4p, b4p, pool)


@functools.partial(jax.jit, static_argnames=("out_dim",))
def gcn_forward(x, adj, prepared, *, out_dim):
    w1, b1, w2, b2, w3, b3, w4p, b4p, pool = prepared
    tb, tbn = pool.shape
    B, N, Din = x.shape
    assert tbn // tb == N, "prepared params were built for a different node count"
    dp = w4p.shape[1]

    # Pad batch only when needed (padded graphs are sliced off at the end).
    Bp = _round_up(B, tb)
    if Bp != B:
        x = jnp.pad(x, ((0, Bp - B), (0, 0), (0, 0)))
        adj = jnp.pad(adj, ((0, Bp - B), (0, 0), (0, 0)))
    G = Bp // tb

    # Flatten node features once; BlockSpec hands the kernel (TB*N, Din) slabs.
    xf = x.reshape(Bp * N, Din)

    # Block-diagonal adjacency per grid step: TB tiny (N,N) graph adjacencies become a
    # single (TB*N, TB*N) bf16 operand -> one MXU-filling matmul in the kernel.
    adj_r = adj.reshape(G, tb, N, N).astype(jnp.bfloat16)
    eye = jnp.eye(tb, dtype=jnp.bfloat16)
    bd = jnp.einsum("gtij,ts->gtisj", adj_r, eye).reshape(G, tbn, tbn)

    full = lambda a: pl.BlockSpec(a.shape, lambda g: (0,) * a.ndim)

    out = pl.pallas_call(
        gcn_kernel,
        out_shape=jax.ShapeDtypeStruct((Bp, dp), jnp.float32),
        grid_spec=pltpu.PrefetchScalarGridSpec(
            num_scalar_prefetch=0,
            grid=(G,),
            in_specs=[
                pl.BlockSpec((tbn, Din), lambda g: (g, 0)),         # x, flattened (f32)
                pl.BlockSpec((1, tbn, tbn), lambda g: (g, 0, 0)),   # block-diag adj (bf16)
                full(pool),
                full(w1), full(b1),
                full(w2), full(b2),
                full(w3), full(b3),
                full(w4p), full(b4p),
            ],
            out_specs=pl.BlockSpec((tb, dp), lambda g: (g, 0)),
        ),
        compiler_params=pltpu.CompilerParams(
            dimension_semantics=("parallel",),
            vmem_limit_bytes=32 * 1024 * 1024,
        ),
    )(xf, bd, pool, w1, b1, w2, b2, w3, b3, w4p, b4p)

    return out[:B, :out_dim]


def gcn_reference(x, adj, params):
    # Pure-JAX fp32 reference matching the PyTorch module (eval mode).
    w1, b1, w2, b2, w3, b3, w4, b4 = params
    h = jnp.einsum("bij,bjd->bid", adj, x @ w1) + b1
    h = _gelu_exact(h)
    h = jnp.maximum(h @ w2 + b2, 0.0)
    h = jnp.maximum(h @ w3 + b3, 0.0)
    h = h @ w4 + b4
    return h.mean(axis=1)


def init_params(key, input_dim, hidden_dim, output_dim):
    ks = jax.random.split(key, 8)

    def dense(kw, kb, fan_in, fan_out):
        bound = 1.0 / jnp.sqrt(fan_in)
        w = jax.random.uniform(kw, (fan_in, fan_out), jnp.float32, -bound, bound)
        b = jax.random.uniform(kb, (1, fan_out), jnp.float32, -bound, bound)
        return w, b

    w1, b1 = dense(ks[0], ks[1], input_dim, hidden_dim)
    w2, b2 = dense(ks[2], ks[3], hidden_dim, hidden_dim // 2)
    w3, b3 = dense(ks[4], ks[5], hidden_dim // 2, hidden_dim // 4)
    w4, b4 = dense(ks[6], ks[7], hidden_dim // 4, output_dim)
    return (w1, b1, w2, b2, w3, b3, w4, b4)


if __name__ == "__main__":
    key = jax.random.PRNGKey(0)
    k_x, k_adj, k_p = jax.random.split(key, 3)

    B, N = 32, 16                 # batch of graphs, nodes per graph
    input_dim, hidden_dim, output_dim = 8, 32, 4
    tb = 16                       # grid = 2: keeps both v7x TCs busy; use tb=32 on v5e/v6e

    x = jax.random.normal(k_x, (B, N, input_dim), jnp.float32)

    # symmetric, self-looped, row-normalized dense adjacency
    a = (jax.random.uniform(k_adj, (B, N, N)) > 0.7).astype(jnp.float32)
    a = jnp.maximum(a, jnp.swapaxes(a, 1, 2)) + jnp.eye(N)[None]
    adj = a / jnp.sum(a, axis=-1, keepdims=True)

    params = init_params(k_p, input_dim, hidden_dim, output_dim)
    prepared = prepare_gcn_params(params, n=N, tb=tb)   # one-time setup, off the hot path

    out = gcn_forward(x, adj, prepared, out_dim=output_dim)
    jax.block_until_ready(out)
    assert out.shape == (B, output_dim)

    ref = gcn_reference(x, adj, params)
    max_err = float(jnp.max(jnp.abs(out - ref)))
    assert max_err < 5e-2, f"max abs error {max_err}"

    print("KERNEL_OK")
</pallas_src>

<mosaic_0001>
module attributes {stable_mosaic.version = 11 : i64} {
  func.func @gcn_kernel(%arg0: i32, %arg1: memref<256x8xf32, #tpu.memory_space<vmem>>, %arg2: memref<1x256x256xbf16, #tpu.memory_space<vmem>>, %arg3: memref<16x256xbf16, #tpu.memory_space<vmem>>, %arg4: memref<8x32xbf16, #tpu.memory_space<vmem>>, %arg5: memref<1x32xf32, #tpu.memory_space<vmem>>, %arg6: memref<32x16xbf16, #tpu.memory_space<vmem>>, %arg7: memref<1x16xf32, #tpu.memory_space<vmem>>, %arg8: memref<16x8xbf16, #tpu.memory_space<vmem>>, %arg9: memref<1x8xf32, #tpu.memory_space<vmem>>, %arg10: memref<8x128xbf16, #tpu.memory_space<vmem>>, %arg11: memref<1x128xf32, #tpu.memory_space<vmem>>, %arg12: memref<16x128xf32, #tpu.memory_space<vmem>>) attributes {dimension_semantics = [#tpu.dimension_semantics<parallel>], iteration_bounds = array<i64: 2>, scalar_prefetch = 0 : i64, scratch_operands = 0 : i64, tpu.core_type = #tpu.core_type<tc>, window_params = [{transform_indices = @transform_0, window_bounds = array<i64: 256, 8>}, {transform_indices = @transform_1, window_bounds = array<i64: 1, 256, 256>}, {pipeline_mode = #tpu.pipeline_mode<synchronous>, transform_indices = @transform_2, window_bounds = array<i64: 16, 256>}, {pipeline_mode = #tpu.pipeline_mode<synchronous>, transform_indices = @transform_3, window_bounds = array<i64: 8, 32>}, {pipeline_mode = #tpu.pipeline_mode<synchronous>, transform_indices = @transform_4, window_bounds = array<i64: 1, 32>}, {pipeline_mode = #tpu.pipeline_mode<synchronous>, transform_indices = @transform_5, window_bounds = array<i64: 32, 16>}, {pipeline_mode = #tpu.pipeline_mode<synchronous>, transform_indices = @transform_6, window_bounds = array<i64: 1, 16>}, {pipeline_mode = #tpu.pipeline_mode<synchronous>, transform_indices = @transform_7, window_bounds = array<i64: 16, 8>}, {pipeline_mode = #tpu.pipeline_mode<synchronous>, transform_indices = @transform_8, window_bounds = array<i64: 1, 8>}, {pipeline_mode = #tpu.pipeline_mode<synchronous>, transform_indices = @transform_9, window_bounds = array<i64: 8, 128>}, {pipeline_mode = #tpu.pipeline_mode<synchronous>, transform_indices = @transform_10, window_bounds = array<i64: 1, 128>}, {transform_indices = @transform_11, window_bounds = array<i64: 16, 128>}]} {
    %c0 = arith.constant 0 : index
    %c0_0 = arith.constant 0 : index
    %0 = vector.load %arg1[%c0, %c0_0] : memref<256x8xf32, #tpu.memory_space<vmem>>, vector<256x8xf32>
    %1 = arith.truncf %0 : vector<256x8xf32> to vector<256x8xbf16>
    %c0_1 = arith.constant 0 : index
    %c0_2 = arith.constant 0 : index
    %c0_3 = arith.constant 0 : index
    %2 = vector.load %arg2[%c0_1, %c0_2, %c0_3] : memref<1x256x256xbf16, #tpu.memory_space<vmem>>, vector<1x256x256xbf16>
    %3 = vector.shape_cast %2 : vector<1x256x256xbf16> to vector<256x256xbf16>
    %cst = arith.constant dense<0.000000e+00> : vector<256x8xf32>
    %4 = tpu.matmul %3, %1, %cst {dimension_numbers = #tpu.dot_dimension_numbers<[1], [0], [0], [1], [0, 0, 1, 1], [], []>} : vector<256x256xbf16>, vector<256x8xbf16>, vector<256x8xf32> -> vector<256x8xf32>
    %5 = arith.truncf %4 : vector<256x8xf32> to vector<256x8xbf16>
    %c0_4 = arith.constant 0 : index
    %c0_5 = arith.constant 0 : index
    %6 = vector.load %arg4[%c0_4, %c0_5] : memref<8x32xbf16, #tpu.memory_space<vmem>>, vector<8x32xbf16>
    %cst_6 = arith.constant dense<0.000000e+00> : vector<256x32xf32>
    %7 = tpu.matmul %5, %6, %cst_6 {dimension_numbers = #tpu.dot_dimension_numbers<[1], [0], [0], [1], [0, 0, 1, 1], [], []>} : vector<256x8xbf16>, vector<8x32xbf16>, vector<256x32xf32> -> vector<256x32xf32>
    %c0_7 = arith.constant 0 : index
    %c0_8 = arith.constant 0 : index
    %8 = vector.load %arg5[%c0_7, %c0_8] : memref<1x32xf32, #tpu.memory_space<vmem>>, vector<1x32xf32>
    %9 = vector.broadcast %8 : vector<1x32xf32> to vector<256x32xf32>
    %10 = arith.addf %7, %9 : vector<256x32xf32>
    %cst_9 = arith.constant 5.000000e-01 : f32
    %11 = vector.broadcast %cst_9 : f32 to vector<256x32xf32>
    %12 = arith.mulf %11, %10 : vector<256x32xf32>
    %cst_10 = arith.constant 0.707106769 : f32
    %13 = vector.broadcast %cst_10 : f32 to vector<256x32xf32>
    %14 = arith.mulf %10, %13 : vector<256x32xf32>
    %15 = math.erf %14 : vector<256x32xf32>
    %cst_11 = arith.constant 1.000000e+00 : f32
    %16 = vector.broadcast %cst_11 : f32 to vector<256x32xf32>
    %17 = arith.addf %16, %15 : vector<256x32xf32>
    %18 = arith.mulf %12, %17 : vector<256x32xf32>
    %19 = arith.truncf %18 : vector<256x32xf32> to vector<256x32xbf16>
    %c0_12 = arith.constant 0 : index
    %c0_13 = arith.constant 0 : index
    %20 = vector.load %arg6[%c0_12, %c0_13] : memref<32x16xbf16, #tpu.memory_space<vmem>>, vector<32x16xbf16>
    %cst_14 = arith.constant dense<0.000000e+00> : vector<256x16xf32>
    %21 = tpu.matmul %19, %20, %cst_14 {dimension_numbers = #tpu.dot_dimension_numbers<[1], [0], [0], [1], [0, 0, 1, 1], [], []>} : vector<256x32xbf16>, vector<32x16xbf16>, vector<256x16xf32> -> vector<256x16xf32>
    %c0_15 = arith.constant 0 : index
    %c0_16 = arith.constant 0 : index
    %22 = vector.load %arg7[%c0_15, %c0_16] : memref<1x16xf32, #tpu.memory_space<vmem>>, vector<1x16xf32>
    %23 = vector.broadcast %22 : vector<1x16xf32> to vector<256x16xf32>
    %24 = arith.addf %21, %23 : vector<256x16xf32>
    %cst_17 = arith.constant 0.000000e+00 : f32
    %25 = vector.broadcast %cst_17 : f32 to vector<256x16xf32>
    %26 = arith.maximumf %24, %25 : vector<256x16xf32>
    %27 = arith.truncf %26 : vector<256x16xf32> to vector<256x16xbf16>
    %c0_18 = arith.constant 0 : index
    %c0_19 = arith.constant 0 : index
    %28 = vector.load %arg8[%c0_18, %c0_19] : memref<16x8xbf16, #tpu.memory_space<vmem>>, vector<16x8xbf16>
    %cst_20 = arith.constant dense<0.000000e+00> : vector<256x8xf32>
    %29 = tpu.matmul %27, %28, %cst_20 {dimension_numbers = #tpu.dot_dimension_numbers<[1], [0], [0], [1], [0, 0, 1, 1], [], []>} : vector<256x16xbf16>, vector<16x8xbf16>, vector<256x8xf32> -> vector<256x8xf32>
    %c0_21 = arith.constant 0 : index
    %c0_22 = arith.constant 0 : index
    %30 = vector.load %arg9[%c0_21, %c0_22] : memref<1x8xf32, #tpu.memory_space<vmem>>, vector<1x8xf32>
    %31 = vector.broadcast %30 : vector<1x8xf32> to vector<256x8xf32>
    %32 = arith.addf %29, %31 : vector<256x8xf32>
    %cst_23 = arith.constant 0.000000e+00 : f32
    %33 = vector.broadcast %cst_23 : f32 to vector<256x8xf32>
    %34 = arith.maximumf %32, %33 : vector<256x8xf32>
    %c0_24 = arith.constant 0 : index
    %c0_25 = arith.constant 0 : index
    %35 = vector.load %arg3[%c0_24, %c0_25] : memref<16x256xbf16, #tpu.memory_space<vmem>>, vector<16x256xbf16>
    %36 = arith.truncf %34 : vector<256x8xf32> to vector<256x8xbf16>
    %cst_26 = arith.constant dense<0.000000e+00> : vector<16x8xf32>
    %37 = tpu.matmul %35, %36, %cst_26 {dimension_numbers = #tpu.dot_dimension_numbers<[1], [0], [0], [1], [0, 0, 1, 1], [], []>} : vector<16x256xbf16>, vector<256x8xbf16>, vector<16x8xf32> -> vector<16x8xf32>
    %38 = arith.truncf %37 : vector<16x8xf32> to vector<16x8xbf16>
    %c0_27 = arith.constant 0 : index
    %c0_28 = arith.constant 0 : index
    %39 = vector.load %arg10[%c0_27, %c0_28] : memref<8x128xbf16, #tpu.memory_space<vmem>>, vector<8x128xbf16>
    %cst_29 = arith.constant dense<0.000000e+00> : vector<16x128xf32>
    %40 = tpu.matmul %38, %39, %cst_29 {dimension_numbers = #tpu.dot_dimension_numbers<[1], [0], [0], [1], [0, 0, 1, 1], [], []>} : vector<16x8xbf16>, vector<8x128xbf16>, vector<16x128xf32> -> vector<16x128xf32>
    %c0_30 = arith.constant 0 : index
    %c0_31 = arith.constant 0 : index
    %41 = vector.load %arg11[%c0_30, %c0_31] : memref<1x128xf32, #tpu.memory_space<vmem>>, vector<1x128xf32>
    %42 = vector.broadcast %41 : vector<1x128xf32> to vector<16x128xf32>
    %43 = arith.addf %40, %42 : vector<16x128xf32>
    %c0_32 = arith.constant 0 : index
    %c0_33 = arith.constant 0 : index
    %44 = vector.load %arg12[%c0_32, %c0_33] : memref<16x128xf32, #tpu.memory_space<vmem>>, vector<16x128xf32>
    tpu.vector_store %arg12[%c0_32, %c0_33], %43 {strides = array<i32>} : memref<16x128xf32, #tpu.memory_space<vmem>>, vector<16x128xf32>,
    return
  }
  func.func @transform_0(%arg0: i32) -> (i32, i32) {
    %c0_i32 = arith.constant 0 : i32
    %c0_i32_0 = arith.constant 0 : i32
    return %arg0, %c0_i32 : i32, i32
  }
  func.func @transform_1(%arg0: i32) -> (i32, i32, i32) {
    %c0_i32 = arith.constant 0 : i32
    %c0_i32_0 = arith.constant 0 : i32
    %c0_i32_1 = arith.constant 0 : i32
    return %arg0, %c0_i32, %c0_i32_0 : i32, i32, i32
  }
  func.func @transform_2(%arg0: i32) -> (i32, i32) {
    %c0_i32 = arith.constant 0 : i32
    %c0_i32_0 = arith.constant 0 : i32
    %c0_i32_1 = arith.constant 0 : i32
    return %c0_i32, %c0_i32_0 : i32, i32
  }
  func.func @transform_3(%arg0: i32) -> (i32, i32) {
    %c0_i32 = arith.constant 0 : i32
    %c0_i32_0 = arith.constant 0 : i32
    %c0_i32_1 = arith.constant 0 : i32
    return %c0_i32, %c0_i32_0 : i32, i32
  }
  func.func @transform_4(%arg0: i32) -> (i32, i32) {
    %c0_i32 = arith.constant 0 : i32
    %c0_i32_0 = arith.constant 0 : i32
    %c0_i32_1 = arith.constant 0 : i32
    return %c0_i32, %c0_i32_0 : i32, i32
  }
  func.func @transform_5(%arg0: i32) -> (i32, i32) {
    %c0_i32 = arith.constant 0 : i32
    %c0_i32_0 = arith.constant 0 : i32
    %c0_i32_1 = arith.constant 0 : i32
    return %c0_i32, %c0_i32_0 : i32, i32
  }
  func.func @transform_6(%arg0: i32) -> (i32, i32) {
    %c0_i32 = arith.constant 0 : i32
    %c0_i32_0 = arith.constant 0 : i32
    %c0_i32_1 = arith.constant 0 : i32
    return %c0_i32, %c0_i32_0 : i32, i32
  }
  func.func @transform_7(%arg0: i32) -> (i32, i32) {
    %c0_i32 = arith.constant 0 : i32
    %c0_i32_0 = arith.constant 0 : i32
    %c0_i32_1 = arith.constant 0 : i32
    return %c0_i32, %c0_i32_0 : i32, i32
  }
  func.func @transform_8(%arg0: i32) -> (i32, i32) {
    %c0_i32 = arith.constant 0 : i32
    %c0_i32_0 = arith.constant 0 : i32
    %c0_i32_1 = arith.constant 0 : i32
    return %c0_i32, %c0_i32_0 : i32, i32
  }
  func.func @transform_9(%arg0: i32) -> (i32, i32) {
    %c0_i32 = arith.constant 0 : i32
    %c0_i32_0 = arith.constant 0 : i32
    %c0_i32_1 = arith.constant 0 : i32
    return %c0_i32, %c0_i32_0 : i32, i32
  }
  func.func @transform_10(%arg0: i32) -> (i32, i32) {
    %c0_i32 = arith.constant 0 : i32
    %c0_i32_0 = arith.constant 0 : i32
    %c0_i32_1 = arith.constant 0 : i32
    return %c0_i32, %c0_i32_0 : i32, i32
  }
  func.func @transform_11(%arg0: i32) -> (i32, i32) {
    %c0_i32 = arith.constant 0 : i32
    %c0_i32_0 = arith.constant 0 : i32
    return %arg0, %c0_i32 : i32, i32
  }
}

</mosaic_0001>

<llo_original>
// kernel: gcn_forward.1
$region0: #{gcn_forward.1}
  #allocation0 [shape = 'u32[]', space=smem, size = 0x4, offset = 0x4, fixed_abs, tag = 'smem constant byte address 0x4 - core index']
  #allocation1 [shape = 'u32[144,128]{1,0:T(1,128)}', space=vmem, size = 0x12000, scoped, tag = 'internal scratch']
  %s0 = inlined_call_operand.vmem [shape: f32[512,8], index: 0, kind: input, shape index: {}]
  %s1 = inlined_call_operand.vmem [shape: bf16[2,256,256], index: 1, kind: input, shape index: {}]
  %s2 = inlined_call_operand.vmem [shape: bf16[16,256], index: 2, kind: input, shape index: {}]
  %s3 = inlined_call_operand.vmem [shape: bf16[8,32], index: 3, kind: input, shape index: {}]
  %s4 = inlined_call_operand.vmem [shape: f32[1,32], index: 4, kind: input, shape index: {}]
  %s5 = inlined_call_operand.vmem [shape: bf16[32,16], index: 5, kind: input, shape index: {}]
  %s6 = inlined_call_operand.vmem [shape: f32[1,16], index: 6, kind: input, shape index: {}]
  %s7 = inlined_call_operand.vmem [shape: bf16[16,8], index: 7, kind: input, shape index: {}]
  %s8 = inlined_call_operand.vmem [shape: f32[1,8], index: 8, kind: input, shape index: {}]
  %s9 = inlined_call_operand.vmem [shape: bf16[8,128], index: 9, kind: input, shape index: {}]
  %s10 = inlined_call_operand.vmem [shape: f32[1,128], index: 10, kind: input, shape index: {}]
  %s11 = inlined_call_operand.vmem [shape: f32[32,128], index: 11, kind: output, shape index: {}]
  %s12 = sld [smem:[#allocation0]]
  $region77: #{gcn_forward.1} parent=0
    _
  %s14 = ssub.s32 1, %s12
  %s15 = scalar_select 0, %s14, %s12
  loop: start=0, step=1, limit=4
  $region2: #{gcn_forward.1} parent=0 // loop_pre_header
    _
  $region3: #{gcn_forward.1} parent=0 // loop_header
    %s17 = sphi 0, %s21
    %p18 = scmp.ge.s32.totalorder %s17, 4
    %s27 = sphi 0, %s29
    %s30 = sphi 0, %s27
    %s31 = sphi 0, %s30
    %s47 = sphi 0, %s31
    %s53 = sphi 0, %s55
    %s56 = sphi 0, %s53
    %s57 = sphi 0, %s56
    %s73 = sphi 0, %s57
    %s77 = sphi 0, %s77
    %s79 = sphi 0, %s77
    %s80 = sphi 0, %s79
    %s94 = sphi 0, %s80
    %s98 = sphi 0, %s98
    %s100 = sphi 0, %s98
    %s101 = sphi 0, %s100
    %s115 = sphi 0, %s101
    %s119 = sphi 0, %s119
    %s121 = sphi 0, %s119
    %s122 = sphi 0, %s121
    %s136 = sphi 0, %s122
    %s140 = sphi 0, %s140
    %s142 = sphi 0, %s140
    %s143 = sphi 0, %s142
    %s157 = sphi 0, %s143
    %s161 = sphi 0, %s161
    %s163 = sphi 0, %s161
    %s164 = sphi 0, %s163
    %s178 = sphi 0, %s164
    %s182 = sphi 0, %s182
    %s184 = sphi 0, %s182
    %s185 = sphi 0, %s184
    %s199 = sphi 0, %s185
    %s203 = sphi 0, %s203
    %s205 = sphi 0, %s203
    %s206 = sphi 0, %s205
    %s220 = sphi 0, %s206
    %s224 = sphi 0, %s224
    %s226 = sphi 0, %s224
    %s227 = sphi 0, %s226
    %s241 = sphi 0, %s227
    %s245 = sphi 0, %s245
    %s247 = sphi 0, %s245
    %s248 = sphi 0, %s247
    %s262 = sphi 0, %s248
    %s268 = sphi 0, %s270
    %s271 = sphi 0, %s268
    %s272 = sphi 0, %s271
    %s288 = sphi 0, %s272
  $region4: #{gcn_forward.1} parent=0 // loop_header_branch
    %20 = sbr.rel (%p18) target = $region8
  $region5: #{gcn_forward.1} parent=0 // loop_body
    %s22 = ssub.s32 %s17, 1
    %s23 = ssub.s32 %s17, 2
    %s24 = sadd.s32 %s17, 1
    %s25 = ssub.s32 %s17, %s24
    %p26 = scmp.eq.s32.totalorder %s25, 0
    %s28 = sadd.s32 %s27, 1
    %s29 = scalar_select %p26, %s27, %s28
    %p32 = pneg %p26
    %p33 = scmp.eq.s32.totalorder %s17, 1
    %p34 = por %p32, %p33
    %p35 = scmp.ne.s32.totalorder %s27, %s30
    %p36 = scmp.eq.s32.totalorder %s17, 0
    %p37 = por %p35, %p36
    %p38 = scmp.ne.s32.totalorder %s27, %s30
    %p39 = scmp.eq.s32.totalorder %s22, 1
    %p40 = por %p38, %p39
    %p41 = scmp.ne.s32.totalorder %s30, %s31
    %p42 = scmp.eq.s32.totalorder %s22, 0
    %p43 = por %p41, %p42
    %p44 = scmp.ne.s32.totalorder %s30, %s31
    %p45 = scmp.eq.s32.totalorder %s23, 1
    %p46 = por %p44, %p45
    %p48 = scmp.ne.s32.totalorder %s31, %s47
    %p49 = scmp.eq.s32.totalorder %s23, 0
    %p50 = por %p48, %p49
    %s51 = ssub.s32 %s17, %s24
    %p52 = scmp.eq.s32.totalorder %s51, 0
    %s54 = sadd.s32 %s53, 1
    %s55 = scalar_select %p52, %s53, %s54
    %p58 = pneg %p52
    %p59 = scmp.eq.s32.totalorder %s17, 1
    %p60 = por %p58, %p59
    %p61 = scmp.ne.s32.totalorder %s53, %s56
    %p62 = scmp.eq.s32.totalorder %s17, 0
    %p63 = por %p61, %p62
    %p64 = scmp.ne.s32.totalorder %s53, %s56
    %p65 = scmp.eq.s32.totalorder %s22, 1
    %p66 = por %p64, %p65
    %p67 = scmp.ne.s32.totalorder %s56, %s57
    %p68 = scmp.eq.s32.totalorder %s22, 0
    %p69 = por %p67, %p68
    %p70 = scmp.ne.s32.totalorder %s56, %s57
    %p71 = scmp.eq.s32.totalorder %s23, 1
    %p72 = por %p70, %p71
    %p74 = scmp.ne.s32.totalorder %s57, %s73
    %p75 = scmp.eq.s32.totalorder %s23, 0
    %p76 = por %p74, %p75
    %s78 = sadd.s32 %s77, 1
    %p81 = scmp.eq.s32.totalorder %s17, 1
    %p82 = scmp.ne.s32.totalorder %s77, %s79
    %p83 = scmp.eq.s32.totalorder %s17, 0
    %p84 = por %p82, %p83
    %p85 = scmp.ne.s32.totalorder %s77, %s79
    %p86 = scmp.eq.s32.totalorder %s22, 1
    %p87 = por %p85, %p86
    %p88 = scmp.ne.s32.totalorder %s79, %s80
    %p89 = scmp.eq.s32.totalorder %s22, 0
    %p90 = por %p88, %p89
    %p91 = scmp.ne.s32.totalorder %s79, %s80
    %p92 = scmp.eq.s32.totalorder %s23, 1
    %p93 = por %p91, %p92
    %p95 = scmp.ne.s32.totalorder %s80, %s94
    %p96 = scmp.eq.s32.totalorder %s23, 0
    %p97 = por %p95, %p96
    %s99 = sadd.s32 %s98, 1
    %p102 = scmp.eq.s32.totalorder %s17, 1
    %p103 = scmp.ne.s32.totalorder %s98, %s100
    %p104 = scmp.eq.s32.totalorder %s17, 0
    %p105 = por %p103, %p104
    %p106 = scmp.ne.s32.totalorder %s98, %s100
    %p107 = scmp.eq.s32.totalorder %s22, 1
    %p108 = por %p106, %p107
    %p109 = scmp.ne.s32.totalorder %s100, %s101
    %p110 = scmp.eq.s32.totalorder %s22, 0
    %p111 = por %p109, %p110
    %p112 = scmp.ne.s32.totalorder %s100, %s101
    %p113 = scmp.eq.s32.totalorder %s23, 1
    %p114 = por %p112, %p113
    %p116 = scmp.ne.s32.totalorder %s101, %s115
    %p117 = scmp.eq.s32.totalorder %s23, 0
    %p118 = por %p116, %p117
    %s120 = sadd.s32 %s119, 1
    %p123 = scmp.eq.s32.totalorder %s17, 1
    %p124 = scmp.ne.s32.totalorder %s119, %s121
    %p125 = scmp.eq.s32.totalorder %s17, 0
    %p126 = por %p124, %p125
    %p127 = scmp.ne.s32.totalorder %s119, %s121
    %p128 = scmp.eq.s32.totalorder %s22, 1
    %p129 = por %p127, %p128
    %p130 = scmp.ne.s32.totalorder %s121, %s122
    %p131 = scmp.eq.s32.totalorder %s22, 0
    %p132 = por %p130, %p131
    %p133 = scmp.ne.s32.totalorder %s121, %s122
    %p134 = scmp.eq.s32.totalorder %s23, 1
    %p135 = por %p133, %p134
    %p137 = scmp.ne.s32.totalorder %s122, %s136
    %p138 = scmp.eq.s32.totalorder %s23, 0
    %p139 = por %p137, %p138
    %s141 = sadd.s32 %s140, 1
    %p144 = scmp.eq.s32.totalorder %s17, 1
    %p145 = scmp.ne.s32.totalorder %s140, %s142
    %p146 = scmp.eq.s32.totalorder %s17, 0
    %p147 = por %p145, %p146
    %p148 = scmp.ne.s32.totalorder %s140, %s142
    %p149 = scmp.eq.s32.totalorder %s22, 1
    %p150 = por %p148, %p149
    %p151 = scmp.ne.s32.totalorder %s142, %s143
    %p152 = scmp.eq.s32.totalorder %s22, 0
    %p153 = por %p151, %p152
    %p154 = scmp.ne.s32.totalorder %s142, %s143
    %p155 = scmp.eq.s32.totalorder %s23, 1
    %p156 = por %p154, %p155
    %p158 = scmp.ne.s32.totalorder %s143, %s157
    %p159 = scmp.eq.s32.totalorder %s23, 0
    %p160 = por %p158, %p159
    %s162 = sadd.s32 %s161, 1
    %p165 = scmp.eq.s32.totalorder %s17, 1
    %p166 = scmp.ne.s32.totalorder %s161, %s163
    %p167 = scmp.eq.s32.totalorder %s17, 0
    %p168 = por %p166, %p167
    %p169 = scmp.ne.s32.totalorder %s161, %s163
    %p170 = scmp.eq.s32.totalorder %s22, 1
    %p171 = por %p169, %p170
    %p172 = scmp.ne.s32.totalorder %s163, %s164
    %p173 = scmp.eq.s32.totalorder %s22, 0
    %p174 = por %p172, %p173
    %p175 = scmp.ne.s32.totalorder %s163, %s164
    %p176 = scmp.eq.s32.totalorder %s23, 1
    %p177 = por %p175, %p176
    %p179 = scmp.ne.s32.totalorder %s164, %s178
    %p180 = scmp.eq.s32.totalorder %s23, 0
    %p181 = por %p179, %p180
    %s183 = sadd.s32 %s182, 1
    %p186 = scmp.eq.s32.totalorder %s17, 1
    %p187 = scmp.ne.s32.totalorder %s182, %s184
    %p188 = scmp.eq.s32.totalorder %s17, 0
    %p189 = por %p187, %p188
    %p190 = scmp.ne.s32.totalorder %s182, %s184
    %p191 = scmp.eq.s32.totalorder %s22, 1
    %p192 = por %p190, %p191
    %p193 = scmp.ne.s32.totalorder %s184, %s185
    %p194 = scmp.eq.s32.totalorder %s22, 0
    %p195 = por %p193, %p194
    %p196 = scmp.ne.s32.totalorder %s184, %s185
    %p197 = scmp.eq.s32.totalorder %s23, 1
    %p198 = por %p196, %p197
    %p200 = scmp.ne.s32.totalorder %s185, %s199
    %p201 = scmp.eq.s32.totalorder %s23, 0
    %p202 = por %p200, %p201
    %s204 = sadd.s32 %s203, 1
    %p207 = scmp.eq.s32.totalorder %s17, 1
    %p208 = scmp.ne.s32.totalorder %s203, %s205
    %p209 = scmp.eq.s32.totalorder %s17, 0
    %p210 = por %p208, %p209
    %p211 = scmp.ne.s32.totalorder %s203, %s205
    %p212 = scmp.eq.s32.totalorder %s22, 1
    %p213 = por %p211, %p212
    %p214 = scmp.ne.s32.totalorder %s205, %s206
    %p215 = scmp.eq.s32.totalorder %s22, 0
    %p216 = por %p214, %p215
    %p217 = scmp.ne.s32.totalorder %s205, %s206
    %p218 = scmp.eq.s32.totalorder %s23, 1
    %p219 = por %p217, %p218
    %p221 = scmp.ne.s32.totalorder %s206, %s220
    %p222 = scmp.eq.s32.totalorder %s23, 0
    %p223 = por %p221, %p222
    %s225 = sadd.s32 %s224, 1
    %p228 = scmp.eq.s32.totalorder %s17, 1
    %p229 = scmp.ne.s32.totalorder %s224, %s226
    %p230 = scmp.eq.s32.totalorder %s17, 0
    %p231 = por %p229, %p230
    %p232 = scmp.ne.s32.totalorder %s224, %s226
    %p233 = scmp.eq.s32.totalorder %s22, 1
    %p234 = por %p232, %p233
    %p235 = scmp.ne.s32.totalorder %s226, %s227
    %p236 = scmp.eq.s32.totalorder %s22, 0
    %p237 = por %p235, %p236
    %p238 = scmp.ne.s32.totalorder %s226, %s227
    %p239 = scmp.eq.s32.totalorder %s23, 1
    %p240 = por %p238, %p239
    %p242 = scmp.ne.s32.totalorder %s227, %s241
    %p243 = scmp.eq.s32.totalorder %s23, 0
    %p244 = por %p242, %p243
    %s246 = sadd.s32 %s245, 1
    %p249 = scmp.eq.s32.totalorder %s17, 1
    %p250 = scmp.ne.s32.totalorder %s245, %s247
    %p251 = scmp.eq.s32.totalorder %s17, 0
    %p252 = por %p250, %p251
    %p253 = scmp.ne.s32.totalorder %s245, %s247
    %p254 = scmp.eq.s32.totalorder %s22, 1
    %p255 = por %p253, %p254
    %p256 = scmp.ne.s32.totalorder %s247, %s248
    %p257 = scmp.eq.s32.totalorder %s22, 0
    %p258 = por %p256, %p257
    %p259 = scmp.ne.s32.totalorder %s247, %s248
    %p260 = scmp.eq.s32.totalorder %s23, 1
    %p261 = por %p259, %p260
    %p263 = scmp.ne.s32.totalorder %s248, %s262
    %p264 = scmp.eq.s32.totalorder %s23, 0
    %p265 = por %p263, %p264
    %s266 = ssub.s32 %s17, %s24
    %p267 = scmp.eq.s32.totalorder %s266, 0
    %s269 = sadd.s32 %s268, 1
    %s270 = scalar_select %p267, %s268, %s269
    %p273 = pneg %p267
    %p274 = scmp.eq.s32.totalorder %s17, 1
    %p275 = por %p273, %p274
    %p276 = scmp.ne.s32.totalorder %s268, %s271
    %p277 = scmp.eq.s32.totalorder %s17, 0
    %p278 = por %p276, %p277
    %p279 = scmp.ne.s32.totalorder %s268, %s271
    %p280 = scmp.eq.s32.totalorder %s22, 1
    %p281 = por %p279, %p280
    %p282 = scmp.ne.s32.totalorder %s271, %s272
    %p283 = scmp.eq.s32.totalorder %s22, 0
    %p284 = por %p282, %p283
    %p285 = scmp.ne.s32.totalorder %s271, %s272
    %p286 = scmp.eq.s32.totalorder %s23, 1
    %p287 = por %p285, %p286
    %p289 = scmp.ne.s32.totalorder %s272, %s288
    %p290 = scmp.eq.s32.totalorder %s23, 0
    %p291 = por %p289, %p290
    %p292 = scmp.le.s32.totalorder 1, %s17
    %p293 = scmp.lt.s32.totalorder %s17, 3
    %p294 = pnand %p292, %p293
    %p295 = pneg %p294
    // Predicated region
    $region9: #{gcn_forward.1} parent=5 // pred_check
      _
    $region10: #{gcn_forward.1} parent=5 // pred_check_branch
      %297 = sbr.rel (%p294) target = $region12
    $region11: #{gcn_forward.1} parent=5 // pred_region
      %s298 = ssub.s32 %s17, 1
      // Predicated region
      $region13: #{gcn_forward.1} parent=11 // pred_check
        %p299 = pneg %p90
      $region14: #{gcn_forward.1} parent=11 // pred_check_branch
        %301 = sbr.rel (%p299) target = $region16
      $region15: #{gcn_forward.1} parent=11 // pred_region
        _
      $region16: #{gcn_forward.1} parent=11 // pred_fallthru
        _
      // Predicated region
      $region17: #{gcn_forward.1} parent=11 // pred_check
        %p302 = pneg %p111
      $region18: #{gcn_forward.1} parent=11 // pred_check_branch
        %304 = sbr.rel (%p302) target = $region20
      $region19: #{gcn_forward.1} parent=11 // pred_region
        _
      $region20: #{gcn_forward.1} parent=11 // pred_fallthru
        _
      // Predicated region
      $region21: #{gcn_forward.1} parent=11 // pred_check
        %p305 = pneg %p132
      $region22: #{gcn_forward.1} parent=11 // pred_check_branch
        %307 = sbr.rel (%p305) target = $region24
      $region23: #{gcn_forward.1} parent=11 // pred_region
        _
      $region24: #{gcn_forward.1} parent=11 // pred_fallthru
        _
      // Predicated region
      $region25: #{gcn_forward.1} parent=11 // pred_check
        %p308 = pneg %p153
      $region26: #{gcn_forward.1} parent=11 // pred_check_branch
        %310 = sbr.rel (%p308) target = $region28
      $region27: #{gcn_forward.1} parent=11 // pred_region
        _
      $region28: #{gcn_forward.1} parent=11 // pred_fallthru
        _
      // Predicated region
      $region29: #{gcn_forward.1} parent=11 // pred_check
        %p311 = pneg %p174
      $region30: #{gcn_forward.1} parent=11 // pred_check_branch
        %313 = sbr.rel (%p311) target = $region32
      $region31: #{gcn_forward.1} parent=11 // pred_region
        _
      $region32: #{gcn_forward.1} parent=11 // pred_fallthru
        _
      // Predicated region
      $region33: #{gcn_forward.1} parent=11 // pred_check
        %p314 = pneg %p195
      $region34: #{gcn_forward.1} parent=11 // pred_check_branch
        %316 = sbr.rel (%p314) target = $region36
      $region35: #{gcn_forward.1} parent=11 // pred_region
        _
      $region36: #{gcn_forward.1} parent=11 // pred_fallthru
        _
      // Predicated region
      $region37: #{gcn_forward.1} parent=11 // pred_check
        %p317 = pneg %p216
      $region38: #{gcn_forward.1} parent=11 // pred_check_branch
        %319 = sbr.rel (%p317) target = $region40
      $region39: #{gcn_forward.1} parent=11 // pred_region
        _
      $region40: #{gcn_forward.1} parent=11 // pred_fallthru
        _
      // Predicated region
      $region41: #{gcn_forward.1} parent=11 // pred_check
        %p320 = pneg %p237
      $region42: #{gcn_forward.1} parent=11 // pred_check_branch
        %322 = sbr.rel (%p320) target = $region44
      $region43: #{gcn_forward.1} parent=11 // pred_region
        _
      $region44: #{gcn_forward.1} parent=11 // pred_fallthru
        _
      // Predicated region
      $region45: #{gcn_forward.1} parent=11 // pred_check
        %p323 = pneg %p258
      $region46: #{gcn_forward.1} parent=11 // pred_check_branch
        %325 = sbr.rel (%p323) target = $region48
      $region47: #{gcn_forward.1} parent=11 // pred_region
        _
      $region48: #{gcn_forward.1} parent=11 // pred_fallthru
        _
    $region12: #{gcn_forward.1} parent=5 // pred_fallthru
      _
    %p326 = scmp.lt.s32.totalorder %s17, 2
    // Predicated region
    $region49: #{gcn_forward.1} parent=5 // pred_check
      %p327 = pneg %p326
    $region50: #{gcn_forward.1} parent=5 // pred_check_branch
      %329 = sbr.rel (%p327) target = $region52
    $region51: #{gcn_forward.1} parent=5 // pred_region
      // Predicated region
      $region53: #{gcn_forward.1} parent=51 // pred_check
        %p330 = pneg %p37
      $region54: #{gcn_forward.1} parent=51 // pred_check_branch
        %332 = sbr.rel (%p330) target = $region56
      $region55: #{gcn_forward.1} parent=51 // pred_region
        %s333 = smul.u32 32, %s17
        %p334 = scmp.lt.s32.totalorder %s333, 63
        %s335 = scalar_select %p334, %s333, 63
        %s336 = smul.addr %s335, 8
        %s337 = scalar_lea.vmem %s0, %s336
        %s338 = smul.u32 32, %s17
      $region56: #{gcn_forward.1} parent=51 // pred_fallthru
        _
      // Predicated region
      $region57: #{gcn_forward.1} parent=51 // pred_check
        %p339 = pneg %p63
      $region58: #{gcn_forward.1} parent=51 // pred_check_branch
        %341 = sbr.rel (%p339) target = $region60
      $region59: #{gcn_forward.1} parent=51 // pred_region
        %p342 = scmp.lt.s32.totalorder %s17, 1
        %s343 = scalar_select %p342, %s17, 1
        %s344 = smul.addr %s343, 64
        %s345 = smul.addr %s344, 4
        %s346 = scalar_lea.vmem %s1, %s345
      $region60: #{gcn_forward.1} parent=51 // pred_fallthru
        _
    $region52: #{gcn_forward.1} parent=5 // pred_fallthru
      _
    %p347 = scmp.le.s32.totalorder 1, %s17
    %p348 = scmp.lt.s32.totalorder %s17, 3
    %p349 = pnand %p347, %p348
    %p350 = pneg %p349
    // Predicated region
    $region61: #{gcn_forward.1} parent=5 // pred_check
      _
    $region62: #{gcn_forward.1} parent=5 // pred_check_branch
      %352 = sbr.rel (%p349) target = $region64
    $region63: #{gcn_forward.1} parent=5 // pred_region
      %s353 = ssub.s32 %s17, 1
      %s354 = smul.u32 32, %s22
      %p355 = scmp.lt.s32.totalorder %s354, 63
      %s356 = scalar_select %p355, %s354, 63
      %s357 = smul.addr %s356, 8
      %s358 = scalar_lea.vmem %s0, %s357
      %p359 = pneg %p43
      %p360 = pneg %p40
      %p361 = scmp.lt.s32.totalorder %s22, 1
      %s362 = scalar_select %p361, %s22, 1
      %s363 = smul.addr %s362, 64
      %s364 = smul.addr %s363, 4
      %s365 = scalar_lea.vmem %s1, %s364
      %p366 = pneg %p69
      %p367 = pneg %p66
      %p368 = pneg %p90
      %p369 = pneg %p87
      %p370 = pneg %p111
      %p371 = pneg %p108
      %p372 = pneg %p132
      %p373 = pneg %p129
      %p374 = pneg %p153
      %p375 = pneg %p150
      %p376 = pneg %p174
      %p377 = pneg %p171
      %p378 = pneg %p195
      %p379 = pneg %p192
      %p380 = pneg %p216
      %p381 = pneg %p213
      %p382 = pneg %p237
      %p383 = pneg %p234
      %p384 = pneg %p258
      %p385 = pneg %p255
      %p386 = pneg %p284
      %p387 = pneg %p281
      %s388 = smul.u32 2, %s22
      %p389 = scmp.lt.s32.totalorder %s388, 3
      %s390 = scalar_select %p389, %s388, 3
      %s391 = smul.addr %s390, 8
      %s392 = scalar_lea.vmem %s11, %s391
      %s393 = smul.u32 32, %s22
      %p394 = scmp.lt.s32.totalorder %s393, 63
      %s395 = scalar_select %p394, %s393, 63
      %s396 = smul.addr %s395, 8
      %s397 = scalar_lea.vmem %s0, %s396
      %s398 = smul.u32 32, %s22
      %p399 = scmp.lt.s32.totalorder %s22, 1
      %s400 = scalar_select %p399, %s22, 1
      %s401 = smul.addr %s400, 64
      %s402 = smul.addr %s401, 4
      %s403 = scalar_lea.vmem %s1, %s402
      %s404 = smul.u32 2, %s22
      %p405 = scmp.lt.s32.totalorder %s404, 3
      %s406 = scalar_select %p405, %s404, 3
      %s407 = smul.addr %s406, 8
      %s408 = scalar_lea.vmem %s11, %s407
      %s409 = smul.u32 2, %s22
      %v411 = vld [vmem:[%s397] sm:$0xff]
      %v412 = vld [vmem:[%s397 + $0x8] sm:$0xff]
      %v413 = vld [vmem:[%s397 + $0x10] sm:$0xff]
      %v414 = vld [vmem:[%s397 + $0x18] sm:$0xff]
      %v415 = vld [vmem:[%s397 + $0x20] sm:$0xff]
      %v416 = vld [vmem:[%s397 + $0x28] sm:$0xff]
      %v417 = vld [vmem:[%s397 + $0x30] sm:$0xff]
      %v418 = vld [vmem:[%s397 + $0x38] sm:$0xff]
      %v419 = vld [vmem:[%s397 + $0x40] sm:$0xff]
      %v420 = vld [vmem:[%s397 + $0x48] sm:$0xff]
      %v421 = vld [vmem:[%s397 + $0x50] sm:$0xff]
      %v422 = vld [vmem:[%s397 + $0x58] sm:$0xff]
      %v423 = vld [vmem:[%s397 + $0x60] sm:$0xff]
      %v424 = vld [vmem:[%s397 + $0x68] sm:$0xff]
      %v425 = vld [vmem:[%s397 + $0x70] sm:$0xff]
      %v426 = vld [vmem:[%s397 + $0x78] sm:$0xff]
      %v427 = vld [vmem:[%s397 + $0x80] sm:$0xff]
      %v428 = vld [vmem:[%s397 + $0x88] sm:$0xff]
      %v429 = vld [vmem:[%s397 + $0x90] sm:$0xff]
      %v430 = vld [vmem:[%s397 + $0x98] sm:$0xff]
      %v431 = vld [vmem:[%s397 + $0xa0] sm:$0xff]
      %v432 = vld [vmem:[%s397 + $0xa8] sm:$0xff]
      %v433 = vld [vmem:[%s397 + $0xb0] sm:$0xff]
      %v434 = vld [vmem:[%s397 + $0xb8] sm:$0xff]
      %v435 = vld [vmem:[%s397 + $0xc0] sm:$0xff]
      %v436 = vld [vmem:[%s397 + $0xc8] sm:$0xff]
      %v437 = vld [vmem:[%s397 + $0xd0] sm:$0xff]
      %v438 = vld [vmem:[%s397 + $0xd8] sm:$0xff]
      %v439 = vld [vmem:[%s397 + $0xe0] sm:$0xff]
      %v440 = vld [vmem:[%s397 + $0xe8] sm:$0xff]
      %v441 = vld [vmem:[%s397 + $0xf0] sm:$0xff]
      %v442 = vld [vmem:[%s397 + $0xf8] sm:$0xff]
      %v443 = vpack.c.bf16 %v412, %v411
      %v444 = vpack.c.bf16 %v414, %v413
      %v445 = vpack.c.bf16 %v416, %v415
      %v446 = vpack.c.bf16 %v418, %v417
      %v447 = vpack.c.bf16 %v420, %v419
      %v448 = vpack.c.bf16 %v422, %v421
      %v449 = vpack.c.bf16 %v424, %v423
      %v450 = vpack.c.bf16 %v426, %v425
      %v451 = vpack.c.bf16 %v428, %v427
      %v452 = vpack.c.bf16 %v430, %v429
      %v453 = vpack.c.bf16 %v432, %v431
      %v454 = vpack.c.bf16 %v434, %v433
      %v455 = vpack.c.bf16 %v436, %v435
      %v456 = vpack.c.bf16 %v438, %v437
      %v457 = vpack.c.bf16 %v440, %v439
      %v458 = vpack.c.bf16 %v442, %v441
      %v459 = vld [vmem:[%s403] sm:$0xff]
      %v460 = vld [vmem:[%s403 + $0x8] sm:$0xff]
      %v461 = vld [vmem:[%s403 + $0x10] sm:$0xff]
      %v462 = vld [vmem:[%s403 + $0x18] sm:$0xff]
      %v463 = vld [vmem:[%s403 + $0x20] sm:$0xff]
      %v464 = vld [vmem:[%s403 + $0x28] sm:$0xff]
      %v465 = vld [vmem:[%s403 + $0x30] sm:$0xff]
      %v466 = vld [vmem:[%s403 + $0x38] sm:$0xff]
      %v467 = vld [vmem:[%s403 + $0x40] sm:$0xff]
      %v468 = vld [vmem:[%s403 + $0x48] sm:$0xff]
      %v469 = vld [vmem:[%s403 + $0x50] sm:$0xff]
      %v470 = vld [vmem:[%s403 + $0x58] sm:$0xff]
      %v471 = vld [vmem:[%s403 + $0x60] sm:$0xff]
      %v472 = vld [vmem:[%s403 + $0x68] sm:$0xff]
      %v473 = vld [vmem:[%s403 + $0x70] sm:$0xff]
      %v474 = vld [vmem:[%s403 + $0x78] sm:$0xff]
      %v475 = vld [vmem:[%s403 + $0x80] sm:$0xff]
      %v476 = vld [vmem:[%s403 + $0x88] sm:$0xff]
      %v477 = vld [vmem:[%s403 + $0x90] sm:$0xff]
      %v478 = vld [vmem:[%s403 + $0x98] sm:$0xff]
      %v479 = vld [vmem:[%s403 + $0xa0] sm:$0xff]
      %v480 = vld [vmem:[%s403 + $0xa8] sm:$0xff]
      %v481 = vld [vmem:[%s403 + $0xb0] sm:$0xff]
      %v482 = vld [vmem:[%s403 + $0xb8] sm:$0xff]
      %v483 = vld [vmem:[%s403 + $0xc0] sm:$0xff]
      %v484 = vld [vmem:[%s403 + $0xc8] sm:$0xff]
      %v485 = vld [vmem:[%s403 + $0xd0] sm:$0xff]
      %v486 = vld [vmem:[%s403 + $0xd8] sm:$0xff]
      %v487 = vld [vmem:[%s403 + $0xe0] sm:$0xff]
      %v488 = vld [vmem:[%s403 + $0xe8] sm:$0xff]
      %v489 = vld [vmem:[%s403 + $0xf0] sm:$0xff]
      %v490 = vld [vmem:[%s403 + $0xf8] sm:$0xff]
      %v523 = vunpack.c.l.b16 %v459
      %v524 = vunpack.c.h.b16 %v459
      %v525 = vunpack.c.l.b16 %v460
      %v526 = vunpack.c.h.b16 %v460
      %v527 = vunpack.c.l.b16 %v461
      %v528 = vunpack.c.h.b16 %v461
      %v529 = vunpack.c.l.b16 %v462
      %v530 = vunpack.c.h.b16 %v462
      %v531 = vunpack.c.l.b16 %v463
      %v532 = vunpack.c.h.b16 %v463
      %v533 = vunpack.c.l.b16 %v464
      %v534 = vunpack.c.h.b16 %v464
      %v535 = vunpack.c.l.b16 %v465
      %v536 = vunpack.c.h.b16 %v465
      %v537 = vunpack.c.l.b16 %v466
      %v538 = vunpack.c.h.b16 %v466
      %v539 = vunpack.c.l.b16 %v467
      %v540 = vunpack.c.h.b16 %v467
      %v541 = vunpack.c.l.b16 %v468
      %v542 = vunpack.c.h.b16 %v468
      %v543 = vunpack.c.l.b16 %v469
      %v544 = vunpack.c.h.b16 %v469
      %v545 = vunpack.c.l.b16 %v470
      %v546 = vunpack.c.h.b16 %v470
      %v547 = vunpack.c.l.b16 %v471
      %v548 = vunpack.c.h.b16 %v471
      %v549 = vunpack.c.l.b16 %v472
      %v550 = vunpack.c.h.b16 %v472
      %v551 = vunpack.c.l.b16 %v473
      %v552 = vunpack.c.h.b16 %v473
      %v553 = vunpack.c.l.b16 %v474
      %v554 = vunpack.c.h.b16 %v474
      %v555 = vunpack.c.l.b16 %v475
      %v556 = vunpack.c.h.b16 %v475
      %v557 = vunpack.c.l.b16 %v476
      %v558 = vunpack.c.h.b16 %v476
      %v559 = vunpack.c.l.b16 %v477
      %v560 = vunpack.c.h.b16 %v477
      %v561 = vunpack.c.l.b16 %v478
      %v562 = vunpack.c.h.b16 %v478
      %v563 = vunpack.c.l.b16 %v479
      %v564 = vunpack.c.h.b16 %v479
      %v565 = vunpack.c.l.b16 %v480
      %v566 = vunpack.c.h.b16 %v480
      %v567 = vunpack.c.l.b16 %v481
      %v568 = vunpack.c.h.b16 %v481
      %v569 = vunpack.c.l.b16 %v482
      %v570 = vunpack.c.h.b16 %v482
      %v571 = vunpack.c.l.b16 %v483
      %v572 = vunpack.c.h.b16 %v483
      %v573 = vunpack.c.l.b16 %v484
      %v574 = vunpack.c.h.b16 %v484
      %v575 = vunpack.c.l.b16 %v485
      %v576 = vunpack.c.h.b16 %v485
      %v577 = vunpack.c.l.b16 %v486
      %v578 = vunpack.c.h.b16 %v486
      %v579 = vunpack.c.l.b16 %v487
      %v580 = vunpack.c.h.b16 %v487
      %v581 = vunpack.c.l.b16 %v488
      %v582 = vunpack.c.h.b16 %v488
      %v583 = vunpack.c.l.b16 %v489
      %v584 = vunpack.c.h.b16 %v489
      %v585 = vunpack.c.l.b16 %v490
      %v586 = vunpack.c.h.b16 %v490
      %v587 = vpack.c.b16 %v525, %v523
      %v588 = vpack.c.b16 %v526, %v524
      %v589 = vpack.c.b16 %v529, %v527
      %v590 = vpack.c.b16 %v530, %v528
      %v591 = vpack.c.b16 %v533, %v531
      %v592 = vpack.c.b16 %v534, %v532
      %v593 = vpack.c.b16 %v537, %v535
      %v594 = vpack.c.b16 %v538, %v536
      %v595 = vpack.c.b16 %v541, %v539
      %v596 = vpack.c.b16 %v542, %v540
      %v597 = vpack.c.b16 %v545, %v543
      %v598 = vpack.c.b16 %v546, %v544
      %v599 = vpack.c.b16 %v549, %v547
      %v600 = vpack.c.b16 %v550, %v548
      %v601 = vpack.c.b16 %v553, %v551
      %v602 = vpack.c.b16 %v554, %v552
      %v603 = vpack.c.b16 %v557, %v555
      %v604 = vpack.c.b16 %v558, %v556
      %v605 = vpack.c.b16 %v561, %v559
      %v606 = vpack.c.b16 %v562, %v560
      %v607 = vpack.c.b16 %v565, %v563
      %v608 = vpack.c.b16 %v566, %v564
      %v609 = vpack.c.b16 %v569, %v567
      %v610 = vpack.c.b16 %v570, %v568
      %v611 = vpack.c.b16 %v573, %v571
      %v612 = vpack.c.b16 %v574, %v572
      %v613 = vpack.c.b16 %v577, %v575
      %v614 = vpack.c.b16 %v578, %v576
      %v615 = vpack.c.b16 %v581, %v579
      %v616 = vpack.c.b16 %v582, %v580
      %v617 = vpack.c.b16 %v585, %v583
      %v618 = vpack.c.b16 %v586, %v584
      %651 = vmatprep.subr.bf16.mxu0 0
      %652 = vmatpush1.bf16.msra.mxu0 %v443
      %653 = vmatprep.subr.bf16.mxu0 0
      %654 = vmatpush1.bf16.msra.mxu0 %v444
      %655 = vmatprep.subr.bf16.mxu0 0
      %656 = vmatpush1.bf16.msra.mxu0 %v445
      %657 = vmatprep.subr.bf16.mxu0 0
      %658 = vmatpush1.bf16.msra.mxu0 %v446
      %659 = vmatprep.subr.bf16.mxu0 0
      %660 = vmatpush1.bf16.msra.mxu0 %v447
      %661 = vmatprep.subr.bf16.mxu0 0
      %662 = vmatpush1.bf16.msra.mxu0 %v448
      %663 = vmatprep.subr.bf16.mxu0 0
      %664 = vmatpush1.bf16.msra.mxu0 %v449
      %665 = vmatprep.subr.bf16.mxu0 0
      %666 = vmatpush1.bf16.msra.mxu0 %v450
      %667 = vmatprep.subr.bf16.mxu0 0
      %668 = vmatpush1.bf16.msra.mxu0 %v451
      %669 = vmatprep.subr.bf16.mxu0 0
      %670 = vmatpush1.bf16.msra.mxu0 %v452
      %671 = vmatprep.subr.bf16.mxu0 0
      %672 = vmatpush1.bf16.msra.mxu0 %v453
      %673 = vmatprep.subr.bf16.mxu0 0
      %674 = vmatpush1.bf16.msra.mxu0 %v454
      %675 = vmatprep.subr.bf16.mxu0 0
      %676 = vmatpush1.bf16.msra.mxu0 %v455
      %677 = vmatprep.subr.bf16.mxu0 0
      %678 = vmatpush1.bf16.msra.mxu0 %v456
      %679 = vmatprep.subr.bf16.mxu0 0
      %680 = vmatpush1.bf16.msra.mxu0 %v457
      %681 = vmatprep.subr.bf16.mxu0 0
      %682 = vmatpush1.bf16.msra.mxu0 %v458
      %683 = vmatprep.mubr.bf16.mxu0 %v588
      %684 = vmatmul.mubr.bf16.gmra.mrb[0].mxu0 %v587
      %v685 = vpop.f32.mrb[0].mxu0
      %v686 = vadd.f32 0.0, %v685
      %v687 = vpop.f32.mrb[0].mxu0
      %v688 = vpop.f32.mrb[0].mxu0
      %v689 = vadd.f32 0.0, %v688
      %v690 = vpop.f32.mrb[0].mxu0
      %691 = vmatprep.mubr.bf16.mxu0 %v590
      %692 = vmatmul.mubr.bf16.gmra.mrb[0].mxu0 %v589
      %v693 = vpop.f32.mrb[0].mxu0
      %v694 = vadd.f32 0.0, %v693
      %v695 = vpop.f32.mrb[0].mxu0
      %v696 = vpop.f32.mrb[0].mxu0
      %v697 = vadd.f32 0.0, %v696
      %v698 = vpop.f32.mrb[0].mxu0
      %699 = vmatprep.mubr.bf16.mxu0 %v592
      %700 = vmatmul.mubr.bf16.gmra.mrb[0].mxu0 %v591
      %v701 = vpop.f32.mrb[0].mxu0
      %v702 = vadd.f32 0.0, %v701
      %v703 = vpop.f32.mrb[0].mxu0
      %v704 = vpop.f32.mrb[0].mxu0
      %v705 = vadd.f32 0.0, %v704
      %v706 = vpop.f32.mrb[0].mxu0
      %707 = vmatprep.mubr.bf16.mxu0 %v594
      %708 = vmatmul.mubr.bf16.gmra.mrb[0].mxu0 %v593
      %v709 = vpop.f32.mrb[0].mxu0
      %v710 = vadd.f32 0.0, %v709
      %v711 = vpop.f32.mrb[0].mxu0
      %v712 = vpop.f32.mrb[0].mxu0
      %v713 = vadd.f32 0.0, %v712
      %v714 = vpop.f32.mrb[0].mxu0
      %715 = vmatprep.mubr.bf16.mxu0 %v596
      %716 = vmatmul.mubr.bf16.gmra.mrb[0].mxu0 %v595
      %v717 = vpop.f32.mrb[0].mxu0
      %v718 = vadd.f32 0.0, %v717
      %v719 = vpop.f32.mrb[0].mxu0
      %v720 = vpop.f32.mrb[0].mxu0
      %v721 = vadd.f32 0.0, %v720
      %v722 = vpop.f32.mrb[0].mxu0
      %723 = vmatprep.mubr.bf16.mxu0 %v598
      %724 = vmatmul.mubr.bf16.gmra.mrb[0].mxu0 %v597
      %v725 = vpop.f32.mrb[0].mxu0
      %v726 = vadd.f32 0.0, %v725
      %v727 = vpop.f32.mrb[0].mxu0
      %v728 = vpop.f32.mrb[0].mxu0
      %v729 = vadd.f32 0.0, %v728
      %v730 = vpop.f32.mrb[0].mxu0
      %731 = vmatprep.mubr.bf16.mxu0 %v600
      %732 = vmatmul.mubr.bf16.gmra.mrb[0].mxu0 %v599
      %v733 = vpop.f32.mrb[0].mxu0
      %v734 = vadd.f32 0.0, %v733
      %v735 = vpop.f32.mrb[0].mxu0
      %v736 = vpop.f32.mrb[0].mxu0
      %v737 = vadd.f32 0.0, %v736
      %v738 = vpop.f32.mrb[0].mxu0
      %739 = vmatprep.mubr.bf16.mxu0 %v602
      %740 = vmatmul.mubr.bf16.gmra.mrb[0].mxu0 %v601
      %v741 = vpop.f32.mrb[0].mxu0
      %v742 = vadd.f32 0.0, %v741
      %v743 = vpop.f32.mrb[0].mxu0
      %v744 = vpop.f32.mrb[0].mxu0
      %v745 = vadd.f32 0.0, %v744
      %v746 = vpop.f32.mrb[0].mxu0
      %747 = vmatprep.mubr.bf16.mxu0 %v604
      %748 = vmatmul.mubr.bf16.gmra.mrb[0].mxu0 %v603
      %v749 = vpop.f32.mrb[0].mxu0
      %v750 = vadd.f32 0.0, %v749
      %v751 = vpop.f32.mrb[0].mxu0
      %v752 = vpop.f32.mrb[0].mxu0
      %v753 = vadd.f32 0.0, %v752
      %v754 = vpop.f32.mrb[0].mxu0
      %755 = vmatprep.mubr.bf16.mxu0 %v606
      %756 = vmatmul.mubr.bf16.gmra.mrb[0].mxu0 %v605
      %v757 = vpop.f32.mrb[0].mxu0
      %v758 = vadd.f32 0.0, %v757
      %v759 = vpop.f32.mrb[0].mxu0
      %v760 = vpop.f32.mrb[0].mxu0
      %v761 = vadd.f32 0.0, %v760
      %v762 = vpop.f32.mrb[0].mxu0
      %763 = vmatprep.mubr.bf16.mxu0 %v608
      %764 = vmatmul.mubr.bf16.gmra.mrb[0].mxu0 %v607
      %v765 = vpop.f32.mrb[0].mxu0
      %v766 = vadd.f32 0.0, %v765
      %v767 = vpop.f32.mrb[0].mxu0
      %v768 = vpop.f32.mrb[0].mxu0
      %v769 = vadd.f32 0.0, %v768
      %v770 = vpop.f32.mrb[0].mxu0
      %771 = vmatprep.mubr.bf16.mxu0 %v610
      %772 = vmatmul.mubr.bf16.gmra.mrb[0].mxu0 %v609
      %v773 = vpop.f32.mrb[0].mxu0
      %v774 = vadd.f32 0.0, %v773
      %v775 = vpop.f32.mrb[0].mxu0
      %v776 = vpop.f32.mrb[0].mxu0
      %v777 = vadd.f32 0.0, %v776
      %v778 = vpop.f32.mrb[0].mxu0
      %779 = vmatprep.mubr.bf16.mxu0 %v612
      %780 = vmatmul.mubr.bf16.gmra.mrb[0].mxu0 %v611
      %v781 = vpop.f32.mrb[0].mxu0
      %v782 = vadd.f32 0.0, %v781
      %v783 = vpop.f32.mrb[0].mxu0
      %v784 = vpop.f32.mrb[0].mxu0
      %v785 = vadd.f32 0.0, %v784
      %v786 = vpop.f32.mrb[0].mxu0
      %787 = vmatprep.mubr.bf16.mxu0 %v614
      %788 = vmatmul.mubr.bf16.gmra.mrb[0].mxu0 %v613
      %v789 = vpop.f32.mrb[0].mxu0
      %v790 = vadd.f32 0.0, %v789
      %v791 = vpop.f32.mrb[0].mxu0
      %v792 = vpop.f32.mrb[0].mxu0
      %v793 = vadd.f32 0.0, %v792
      %v794 = vpop.f32.mrb[0].mxu0
      %795 = vmatprep.mubr.bf16.mxu0 %v616
      %796 = vmatmul.mubr.bf16.gmra.mrb[0].mxu0 %v615
      %v797 = vpop.f32.mrb[0].mxu0
      %v798 = vadd.f32 0.0, %v797
      %v799 = vpop.f32.mrb[0].mxu0
      %v800 = vpop.f32.mrb[0].mxu0
      %v801 = vadd.f32 0.0, %v800
      %v802 = vpop.f32.mrb[0].mxu0
      %803 = vmatprep.mubr.bf16.mxu0 %v618
      %804 = vmatmul.mubr.bf16.gmra.mrb[0].mxu0 %v617
      %v805 = vpop.f32.mrb[0].mxu0
      %v806 = vadd.f32 0.0, %v805
      %v807 = vpop.f32.mrb[0].mxu0
      %v808 = vpop.f32.mrb[0].mxu0
      %v809 = vadd.f32 0.0, %v808
      %v810 = vpop.f32.mrb[0].mxu0
      %811 = vdwg.mxu0
      %v812 = vpack.c.bf16 %v689, %v686
      %v813 = vpack.c.bf16 %v697, %v694
      %v814 = vpack.c.bf16 %v705, %v702
      %v815 = vpack.c.bf16 %v713, %v710
      %v816 = vpack.c.bf16 %v721, %v718
      %v817 = vpack.c.bf16 %v729, %v726
      %v818 = vpack.c.bf16 %v737, %v734
      %v819 = vpack.c.bf16 %v745, %v742
      %v820 = vpack.c.bf16 %v753, %v750
      %v821 = vpack.c.bf16 %v761, %v758
      %v822 = vpack.c.bf16 %v769, %v766
      %v823 = vpack.c.bf16 %v777, %v774
      %v824 = vpack.c.bf16 %v785, %v782
      %v825 = vpack.c.bf16 %v793, %v790
      %v826 = vpack.c.bf16 %v801, %v798
      %v827 = vpack.c.bf16 %v809, %v806
      %v828 = vld [vmem:[%s3] sm:$0xf]
      %v829 = vld [vmem:[%s4] sm:$0x1]
      %v831 = vlaneseq
      %v832 = vshrl.u32 %v831, 7
      %v833 = vsub.s32 0, %v832
      %v834 = vrot.slane %v829, %v833
      %vm836 = vcmask 64512
      %v838 = vsel %vm836, %v812, 0
      %v841 = vsel %vm836, %v813, 0
      %v844 = vsel %vm836, %v814, 0
      %v847 = vsel %vm836, %v815, 0
      %v850 = vsel %vm836, %v816, 0
      %v853 = vsel %vm836, %v817, 0
      %v856 = vsel %vm836, %v818, 0
      %v859 = vsel %vm836, %v819, 0
      %v862 = vsel %vm836, %v820, 0
      %v865 = vsel %vm836, %v821, 0
      %v868 = vsel %vm836, %v822, 0
      %v871 = vsel %vm836, %v823, 0
      %v874 = vsel %vm836, %v824, 0
      %v877 = vsel %vm836, %v825, 0
      %v880 = vsel %vm836, %v826, 0
      %v883 = vsel %vm836, %v827, 0
      %vm885 = vcmask 1043456
      %v887 = vsel %vm885, %v828, 0
      %889 = vmatprep.subr.bf16.mxu0 0
      %890 = vmatpush1.bf16.msra.mxu0 %v887
      %891 = vmatprep.subr.bf16.mxu0 0
      %892 = vmatpush1.bf16.msra.mxu0 0
      %893 = vmatprep.subr.bf16.mxu0 0
      %894 = vmatpush1.bf16.msra.mxu0 0
      %895 = vmatprep.subr.bf16.mxu0 0
      %896 = vmatpush1.bf16.msra.mxu0 0
      %897 = vmatprep.subr.bf16.mxu0 0
      %898 = vmatpush1.bf16.msra.mxu0 0
      %899 = vmatprep.subr.bf16.mxu0 0
      %900 = vmatpush1.bf16.msra.mxu0 0
      %901 = vmatprep.subr.bf16.mxu0 0
      %902 = vmatpush1.bf16.msra.mxu0 0
      %903 = vmatprep.subr.bf16.mxu0 0
      %904 = vmatpush1.bf16.msra.mxu0 0
      %905 = vmatprep.subr.bf16.mxu0 0
      %906 = vmatpush1.bf16.msra.mxu0 0
      %907 = vmatprep.subr.bf16.mxu0 0
      %908 = vmatpush1.bf16.msra.mxu0 0
      %909 = vmatprep.subr.bf16.mxu0 0
      %910 = vmatpush1.bf16.msra.mxu0 0
      %911 = vmatprep.subr.bf16.mxu0 0
      %912 = vmatpush1.bf16.msra.mxu0 0
      %913 = vmatprep.subr.bf16.mxu0 0
      %914 = vmatpush1.bf16.msra.mxu0 0
      %915 = vmatprep.subr.bf16.mxu0 0
      %916 = vmatpush1.bf16.msra.mxu0 0
      %917 = vmatprep.subr.bf16.mxu0 0
      %918 = vmatpush1.bf16.msra.mxu0 0
      %919 = vmatprep.subr.bf16.mxu0 0
      %920 = vmatpush1.bf16.msra.mxu0 0
      %921 = vmatprep.mubr.bf16.mxu0 0
      %922 = vmatmul.mubr.bf16.gmra.mrb[0].mxu0 %v838
      %v923 = vpop.f32.mrb[0].mxu0
      %v924 = vadd.f32 %v834, %v923
      %v925 = vpop.f32.mrb[0].mxu0
      %v926 = vpop.f32.mrb[0].mxu0
      %v927 = vadd.f32 %v834, %v926
      %v928 = vpop.f32.mrb[0].mxu0
      %929 = vmatprep.mubr.bf16.mxu0 0
      %930 = vmatmul.mubr.bf16.gmra.mrb[0].mxu0 %v841
      %v931 = vpop.f32.mrb[0].mxu0
      %v932 = vadd.f32 %v834, %v931
      %v933 = vpop.f32.mrb[0].mxu0
      %v934 = vpop.f32.mrb[0].mxu0
      %v935 = vadd.f32 %v834, %v934
      %v936 = vpop.f32.mrb[0].mxu0
      %937 = vmatprep.mubr.bf16.mxu0 0
      %938 = vmatmul.mubr.bf16.gmra.mrb[0].mxu0 %v844
      %v939 = vpop.f32.mrb[0].mxu0
      %v940 = vadd.f32 %v834, %v939
      %v941 = vpop.f32.mrb[0].mxu0
      %v942 = vpop.f32.mrb[0].mxu0
      %v943 = vadd.f32 %v834, %v942
      %v944 = vpop.f32.mrb[0].mxu0
      %945 = vmatprep.mubr.bf16.mxu0 0
      %946 = vmatmul.mubr.bf16.gmra.mrb[0].mxu0 %v847
      %v947 = vpop.f32.mrb[0].mxu0
      %v948 = vadd.f32 %v834, %v947
      %v949 = vpop.f32.mrb[0].mxu0
      %v950 = vpop.f32.mrb[0].mxu0
      %v951 = vadd.f32 %v834, %v950
      %v952 = vpop.f32.mrb[0].mxu0
      %953 = vmatprep.mubr.bf16.mxu0 0
      %954 = vmatmul.mubr.bf16.gmra.mrb[0].mxu0 %v850
      %v955 = vpop.f32.mrb[0].mxu0
      %v956 = vadd.f32 %v834, %v955
      %v957 = vpop.f32.mrb[0].mxu0
      %v958 = vpop.f32.mrb[0].mxu0
      %v959 = vadd.f32 %v834, %v958
      %v960 = vpop.f32.mrb[0].mxu0
      %961 = vmatprep.mubr.bf16.mxu0 0
      %962 = vmatmul.mubr.bf16.gmra.mrb[0].mxu0 %v853
      %v963 = vpop.f32.mrb[0].mxu0
      %v964 = vadd.f32 %v834, %v963
      %v965 = vpop.f32.mrb[0].mxu0
      %v966 = vpop.f32.mrb[0].mxu0
      %v967 = vadd.f32 %v834, %v966
      %v968 = vpop.f32.mrb[0].mxu0
      %969 = vmatprep.mubr.bf16.mxu0 0
      %970 = vmatmul.mubr.bf16.gmra.mrb[0].mxu0 %v856
      %v971 = vpop.f32.mrb[0].mxu0
      %v972 = vadd.f32 %v834, %v971
      %v973 = vpop.f32.mrb[0].mxu0
      %v974 = vpop.f32.mrb[0].mxu0
      %v975 = vadd.f32 %v834, %v974
      %v976 = vpop.f32.mrb[0].mxu0
      %977 = vmatprep.mubr.bf16.mxu0 0
      %978 = vmatmul.mubr.bf16.gmra.mrb[0].mxu0 %v859
      %v979 = vpop.f32.mrb[0].mxu0
      %v980 = vadd.f32 %v834, %v979
      %v981 = vpop.f32.mrb[0].mxu0
      %v982 = vpop.f32.mrb[0].mxu0
      %v983 = vadd.f32 %v834, %v982
      %v984 = vpop.f32.mrb[0].mxu0
      %985 = vmatprep.mubr.bf16.mxu0 0
      %986 = vmatmul.mubr.bf16.gmra.mrb[0].mxu0 %v862
      %v987 = vpop.f32.mrb[0].mxu0
      %v988 = vadd.f32 %v834, %v987
      %v989 = vpop.f32.mrb[0].mxu0
      %v990 = vpop.f32.mrb[0].mxu0
      %v991 = vadd.f32 %v834, %v990
      %v992 = vpop.f32.mrb[0].mxu0
      %993 = vmatprep.mubr.bf16.mxu0 0
      %994 = vmatmul.mubr.bf16.gmra.mrb[0].mxu0 %v865
      %v995 = vpop.f32.mrb[0].mxu0
      %v996 = vadd.f32 %v834, %v995
      %v997 = vpop.f32.mrb[0].mxu0
      %v998 = vpop.f32.mrb[0].mxu0
      %v999 = vadd.f32 %v834, %v998
      %v1000 = vpop.f32.mrb[0].mxu0
      %1001 = vmatprep.mubr.bf16.mxu0 0
      %1002 = vmatmul.mubr.bf16.gmra.mrb[0].mxu0 %v868
      %v1003 = vpop.f32.mrb[0].mxu0
      %v1004 = vadd.f32 %v834, %v1003
      %v1005 = vpop.f32.mrb[0].mxu0
      %v1006 = vpop.f32.mrb[0].mxu0
      %v1007 = vadd.f32 %v834, %v1006
      %v1008 = vpop.f32.mrb[0].mxu0
      %1009 = vmatprep.mubr.bf16.mxu0 0
      %1010 = vmatmul.mubr.bf16.gmra.mrb[0].mxu0 %v871
      %v1011 = vpop.f32.mrb[0].mxu0
      %v1012 = vadd.f32 %v834, %v1011
      %v1013 = vpop.f32.mrb[0].mxu0
      %v1014 = vpop.f32.mrb[0].mxu0
      %v1015 = vadd.f32 %v834, %v1014
      %v1016 = vpop.f32.mrb[0].mxu0
      %1017 = vmatprep.mubr.bf16.mxu0 0
      %1018 = vmatmul.mubr.bf16.gmra.mrb[0].mxu0 %v874
      %v1019 = vpop.f32.mrb[0].mxu0
      %v1020 = vadd.f32 %v834, %v1019
      %v1021 = vpop.f32.mrb[0].mxu0
      %v1022 = vpop.f32.mrb[0].mxu0
      %v1023 = vadd.f32 %v834, %v1022
      %v1024 = vpop.f32.mrb[0].mxu0
      %1025 = vmatprep.mubr.bf16.mxu0 0
      %1026 = vmatmul.mubr.bf16.gmra.mrb[0].mxu0 %v877
      %v1027 = vpop.f32.mrb[0].mxu0
      %v1028 = vadd.f32 %v834, %v1027
      %v1029 = vpop.f32.mrb[0].mxu0
      %v1030 = vpop.f32.mrb[0].mxu0
      %v1031 = vadd.f32 %v834, %v1030
      %v1032 = vpop.f32.mrb[0].mxu0
      %1033 = vmatprep.mubr.bf16.mxu0 0
      %1034 = vmatmul.mubr.bf16.gmra.mrb[0].mxu0 %v880
      %v1035 = vpop.f32.mrb[0].mxu0
      %v1036 = vadd.f32 %v834, %v1035
      %v1037 = vpop.f32.mrb[0].mxu0
      %v1038 = vpop.f32.mrb[0].mxu0
      %v1039 = vadd.f32 %v834, %v1038
      %v1040 = vpop.f32.mrb[0].mxu0
      %1041 = vmatprep.mubr.bf16.mxu0 0
      %1042 = vmatmul.mubr.bf16.gmra.mrb[0].mxu0 %v883
      %v1043 = vpop.f32.mrb[0].mxu0
      %v1044 = vadd.f32 %v834, %v1043
      %v1045 = vpop.f32.mrb[0].mxu0
      %v1046 = vpop.f32.mrb[0].mxu0
      %v1047 = vadd.f32 %v834, %v1046
      %v1048 = vpop.f32.mrb[0].mxu0
      %1049 = vdwg.mxu0
      %v1050 = vmul.f32 %v924, 0.5
      %v1051 = vmul.f32 %v927, 0.5
      %v1052 = vmul.f32 %v932, 0.5
      %v1053 = vmul.f32 %v935, 0.5
      %v1054 = vmul.f32 %v940, 0.5
      %v1055 = vmul.f32 %v943, 0.5
      %v1056 = vmul.f32 %v948, 0.5
      %v1057 = vmul.f32 %v951, 0.5
      %v1058 = vmul.f32 %v956, 0.5
      %v1059 = vmul.f32 %v959, 0.5
      %v1060 = vmul.f32 %v964, 0.5
      %v1061 = vmul.f32 %v967, 0.5
      %v1062 = vmul.f32 %v972, 0.5
      %v1063 = vmul.f32 %v975, 0.5
      %v1064 = vmul.f32 %v980, 0.5
      %v1065 = vmul.f32 %v983, 0.5
      %v1066 = vmul.f32 %v988, 0.5
      %v1067 = vmul.f32 %v991, 0.5
      %v1068 = vmul.f32 %v996, 0.5
      %v1069 = vmul.f32 %v999, 0.5
      %v1070 = vmul.f32 %v1004, 0.5
      %v1071 = vmul.f32 %v1007, 0.5
      %v1072 = vmul.f32 %v1012, 0.5
      %v1073 = vmul.f32 %v1015, 0.5
      %v1074 = vmul.f32 %v1020, 0.5
      %v1075 = vmul.f32 %v1023, 0.5
      %v1076 = vmul.f32 %v1028, 0.5
      %v1077 = vmul.f32 %v1031, 0.5
      %v1078 = vmul.f32 %v1036, 0.5
      %v1079 = vmul.f32 %v1039, 0.5
      %v1080 = vmul.f32 %v1044, 0.5
      %v1081 = vmul.f32 %v1047, 0.5
      %v1082 = vmul.f32 %v924, 0.70710677
      %v1083 = vmul.f32 %v927, 0.70710677
      %v1084 = vmul.f32 %v932, 0.70710677
      %v1085 = vmul.f32 %v935, 0.70710677
      %v1086 = vmul.f32 %v940, 0.70710677
      %v1087 = vmul.f32 %v943, 0.70710677
      %v1088 = vmul.f32 %v948, 0.70710677
      %v1089 = vmul.f32 %v951, 0.70710677
      %v1090 = vmul.f32 %v956, 0.70710677
      %v1091 = vmul.f32 %v959, 0.70710677
      %v1092 = vmul.f32 %v964, 0.70710677
      %v1093 = vmul.f32 %v967, 0.70710677
      %v1094 = vmul.f32 %v972, 0.70710677
      %v1095 = vmul.f32 %v975, 0.70710677
      %v1096 = vmul.f32 %v980, 0.70710677
      %v1097 = vmul.f32 %v983, 0.70710677
      %v1098 = vmul.f32 %v988, 0.70710677
      %v1099 = vmul.f32 %v991, 0.70710677
      %v1100 = vmul.f32 %v996, 0.70710677
      %v1101 = vmul.f32 %v999, 0.70710677
      %v1102 = vmul.f32 %v1004, 0.70710677
      %v1103 = vmul.f32 %v1007, 0.70710677
      %v1104 = vmul.f32 %v1012, 0.70710677
      %v1105 = vmul.f32 %v1015, 0.70710677
      %v1106 = vmul.f32 %v1020, 0.70710677
      %v1107 = vmul.f32 %v1023, 0.70710677
      %v1108 = vmul.f32 %v1028, 0.70710677
      %v1109 = vmul.f32 %v1031, 0.70710677
      %v1110 = vmul.f32 %v1036, 0.70710677
      %v1111 = vmul.f32 %v1039, 0.70710677
      %v1112 = vmul.f32 %v1044, 0.70710677
      %v1113 = vmul.f32 %v1047, 0.70710677
      %v1114 = verf.f32.pop %v1082
      %v1115 = verf.f32.pop %v1083
      %v1116 = verf.f32.pop %v1084
      %v1117 = verf.f32.pop %v1085
      %v1118 = verf.f32.pop %v1086
      %v1119 = verf.f32.pop %v1087
      %v1120 = verf.f32.pop %v1088
      %v1121 = verf.f32.pop %v1089
      %v1122 = verf.f32.pop %v1090
      %v1123 = verf.f32.pop %v1091
      %v1124 = verf.f32.pop %v1092
      %v1125 = verf.f32.pop %v1093
      %v1126 = verf.f32.pop %v1094
      %v1127 = verf.f32.pop %v1095
      %v1128 = verf.f32.pop %v1096
      %v1129 = verf.f32.pop %v1097
      %v1130 = verf.f32.pop %v1098
      %v1131 = verf.f32.pop %v1099
      %v1132 = verf.f32.pop %v1100
      %v1133 = verf.f32.pop %v1101
      %v1134 = verf.f32.pop %v1102
      %v1135 = verf.f32.pop %v1103
      %v1136 = verf.f32.pop %v1104
      %v1137 = verf.f32.pop %v1105
      %v1138 = verf.f32.pop %v1106
      %v1139 = verf.f32.pop %v1107
      %v1140 = verf.f32.pop %v1108
      %v1141 = verf.f32.pop %v1109
      %v1142 = verf.f32.pop %v1110
      %v1143 = verf.f32.pop %v1111
      %v1144 = verf.f32.pop %v1112
      %v1145 = verf.f32.pop %v1113
      %v1146 = vadd.f32 %v1114, 1.0
      %v1147 = vadd.f32 %v1115, 1.0
      %v1148 = vadd.f32 %v1116, 1.0
      %v1149 = vadd.f32 %v1117, 1.0
      %v1150 = vadd.f32 %v1118, 1.0
      %v1151 = vadd.f32 %v1119, 1.0
      %v1152 = vadd.f32 %v1120, 1.0
      %v1153 = vadd.f32 %v1121, 1.0
      %v1154 = vadd.f32 %v1122, 1.0
      %v1155 = vadd.f32 %v1123, 1.0
      %v1156 = vadd.f32 %v1124, 1.0
      %v1157 = vadd.f32 %v1125, 1.0
      %v1158 = vadd.f32 %v1126, 1.0
      %v1159 = vadd.f32 %v1127, 1.0
      %v1160 = vadd.f32 %v1128, 1.0
      %v1161 = vadd.f32 %v1129, 1.0
      %v1162 = vadd.f32 %v1130, 1.0
      %v1163 = vadd.f32 %v1131, 1.0
      %v1164 = vadd.f32 %v1132, 1.0
      %v1165 = vadd.f32 %v1133, 1.0
      %v1166 = vadd.f32 %v1134, 1.0
      %v1167 = vadd.f32 %v1135, 1.0
      %v1168 = vadd.f32 %v1136, 1.0
      %v1169 = vadd.f32 %v1137, 1.0
      %v1170 = vadd.f32 %v1138, 1.0
      %v1171 = vadd.f32 %v1139, 1.0
      %v1172 = vadd.f32 %v1140, 1.0
      %v1173 = vadd.f32 %v1141, 1.0
      %v1174 = vadd.f32 %v1142, 1.0
      %v1175 = vadd.f32 %v1143, 1.0
      %v1176 = vadd.f32 %v1144, 1.0
      %v1177 = vadd.f32 %v1145, 1.0
      %v1178 = vmul.f32 %v1050, %v1146
      %v1179 = vmul.f32 %v1051, %v1147
      %v1180 = vmul.f32 %v1052, %v1148
      %v1181 = vmul.f32 %v1053, %v1149
      %v1182 = vmul.f32 %v1054, %v1150
      %v1183 = vmul.f32 %v1055, %v1151
      %v1184 = vmul.f32 %v1056, %v1152
      %v1185 = vmul.f32 %v1057, %v1153
      %v1186 = vmul.f32 %v1058, %v1154
      %v1187 = vmul.f32 %v1059, %v1155
      %v1188 = vmul.f32 %v1060, %v1156
      %v1189 = vmul.f32 %v1061, %v1157
      %v1190 = vmul.f32 %v1062, %v1158
      %v1191 = vmul.f32 %v1063, %v1159
      %v1192 = vmul.f32 %v1064, %v1160
      %v1193 = vmul.f32 %v1065, %v1161
      %v1194 = vmul.f32 %v1066, %v1162
      %v1195 = vmul.f32 %v1067, %v1163
      %v1196 = vmul.f32 %v1068, %v1164
      %v1197 = vmul.f32 %v1069, %v1165
      %v1198 = vmul.f32 %v1070, %v1166
      %v1199 = vmul.f32 %v1071, %v1167
      %v1200 = vmul.f32 %v1072, %v1168
      %v1201 = vmul.f32 %v1073, %v1169
      %v1202 = vmul.f32 %v1074, %v1170
      %v1203 = vmul.f32 %v1075, %v1171
      %v1204 = vmul.f32 %v1076, %v1172
      %v1205 = vmul.f32 %v1077, %v1173
      %v1206 = vmul.f32 %v1078, %v1174
      %v1207 = vmul.f32 %v1079, %v1175
      %v1208 = vmul.f32 %v1080, %v1176
      %v1209 = vmul.f32 %v1081, %v1177
      %v1210 = vpack.c.bf16 %v1179, %v1178
      %v1211 = vpack.c.bf16 %v1181, %v1180
      %v1212 = vpack.c.bf16 %v1183, %v1182
      %v1213 = vpack.c.bf16 %v1185, %v1184
      %v1214 = vpack.c.bf16 %v1187, %v1186
      %v1215 = vpack.c.bf16 %v1189, %v1188
      %v1216 = vpack.c.bf16 %v1191, %v1190
      %v1217 = vpack.c.bf16 %v1193, %v1192
      %v1218 = vpack.c.bf16 %v1195, %v1194
      %v1219 = vpack.c.bf16 %v1197, %v1196
      %v1220 = vpack.c.bf16 %v1199, %v1198
      %v1221 = vpack.c.bf16 %v1201, %v1200
      %v1222 = vpack.c.bf16 %v1203, %v1202
      %v1223 = vpack.c.bf16 %v1205, %v1204
      %v1224 = vpack.c.bf16 %v1207, %v1206
      %v1225 = vpack.c.bf16 %v1209, %v1208
      %v1226 = vld [vmem:[%s5] sm:$0xf]
      %v1227 = vld [vmem:[%s5 + $0x4] sm:$0xf]
      %v1228 = vld [vmem:[%s5 + $0x8] sm:$0xf]
      %v1229 = vld [vmem:[%s5 + $0xc] sm:$0xf]
      %v1230 = vld [vmem:[%s6] sm:$0x1]
      %v1232 = vlaneseq
      %v1233 = vshrl.u32 %v1232, 7
      %v1234 = vsub.s32 0, %v1233
      %v1235 = vrot.slane %v1230, %v1234
      %v1241 = vunpack.c.l.b16 %v1226
      %v1242 = vunpack.c.l.b16 %v1227
      %v1243 = vunpack.c.l.b16 %v1228
      %v1244 = vunpack.c.l.b16 %v1229
      %v1245 = vpack.c.b16 %v1242, %v1241
      %v1246 = vpack.c.b16 %v1244, %v1243
      %vm1249 = vcmask 261120
      %v1251 = vsel %vm1249, %v1210, 0
      %v1254 = vsel %vm1249, %v1211, 0
      %v1257 = vsel %vm1249, %v1212, 0
      %v1260 = vsel %vm1249, %v1213, 0
      %v1263 = vsel %vm1249, %v1214, 0
      %v1266 = vsel %vm1249, %v1215, 0
      %v1269 = vsel %vm1249, %v1216, 0
      %v1272 = vsel %vm1249, %v1217, 0
      %v1275 = vsel %vm1249, %v1218, 0
      %v1278 = vsel %vm1249, %v1219, 0
      %v1281 = vsel %vm1249, %v1220, 0
      %v1284 = vsel %vm1249, %v1221, 0
      %v1287 = vsel %vm1249, %v1222, 0
      %v1290 = vsel %vm1249, %v1223, 0
      %v1293 = vsel %vm1249, %v1224, 0
      %v1296 = vsel %vm1249, %v1225, 0
      %1298 = vmatprep.subr.bf16.mxu0 0
      %1299 = vmatpush1.bf16.msra.mxu0 %v1245
      %1300 = vmatprep.subr.bf16.mxu0 0
      %1301 = vmatpush1.bf16.msra.mxu0 %v1246
      %1302 = vmatprep.subr.bf16.mxu0 0
      %1303 = vmatpush1.bf16.msra.mxu0 0
      %1304 = vmatprep.subr.bf16.mxu0 0
      %1305 = vmatpush1.bf16.msra.mxu0 0
      %1306 = vmatprep.subr.bf16.mxu0 0
      %1307 = vmatpush1.bf16.msra.mxu0 0
      %1308 = vmatprep.subr.bf16.mxu0 0
      %1309 = vmatpush1.bf16.msra.mxu0 0
      %1310 = vmatprep.subr.bf16.mxu0 0
      %1311 = vmatpush1.bf16.msra.mxu0 0
      %1312 = vmatprep.subr.bf16.mxu0 0
      %1313 = vmatpush1.bf16.msra.mxu0 0
      %1314 = vmatprep.subr.bf16.mxu0 0
      %1315 = vmatpush1.bf16.msra.mxu0 0
      %1316 = vmatprep.subr.bf16.mxu0 0
      %1317 = vmatpush1.bf16.msra.mxu0 0
      %1318 = vmatprep.subr.bf16.mxu0 0
      %1319 = vmatpush1.bf16.msra.mxu0 0
      %1320 = vmatprep.subr.bf16.mxu0 0
      %1321 = vmatpush1.bf16.msra.mxu0 0
      %1322 = vmatprep.subr.bf16.mxu0 0
      %1323 = vmatpush1.bf16.msra.mxu0 0
      %1324 = vmatprep.subr.bf16.mxu0 0
      %1325 = vmatpush1.bf16.msra.mxu0 0
      %1326 = vmatprep.subr.bf16.mxu0 0
      %1327 = vmatpush1.bf16.msra.mxu0 0
      %1328 = vmatprep.subr.bf16.mxu0 0
      %1329 = vmatpush1.bf16.msra.mxu0 0
      %1330 = vmatprep.mubr.bf16.mxu0 0
      %1331 = vmatmul.mubr.bf16.gmra.mrb[0].mxu0 %v1251
      %v1332 = vpop.f32.mrb[0].mxu0
      %v1333 = vadd.f32 %v1235, %v1332
      %v1334 = vpop.f32.mrb[0].mxu0
      %v1335 = vpop.f32.mrb[0].mxu0
      %v1336 = vadd.f32 %v1235, %v1335
      %v1337 = vpop.f32.mrb[0].mxu0
      %1338 = vmatprep.mubr.bf16.mxu0 0
      %1339 = vmatmul.mubr.bf16.gmra.mrb[0].mxu0 %v1254
      %v1340 = vpop.f32.mrb[0].mxu0
      %v1341 = vadd.f32 %v1235, %v1340
      %v1342 = vpop.f32.mrb[0].mxu0
      %v1343 = vpop.f32.mrb[0].mxu0
      %v1344 = vadd.f32 %v1235, %v1343
      %v1345 = vpop.f32.mrb[0].mxu0
      %1346 = vmatprep.mubr.bf16.mxu0 0
      %1347 = vmatmul.mubr.bf16.gmra.mrb[0].mxu0 %v1257
      %v1348 = vpop.f32.mrb[0].mxu0
      %v1349 = vadd.f32 %v1235, %v1348
      %v1350 = vpop.f32.mrb[0].mxu0
      %v1351 = vpop.f32.mrb[0].mxu0
      %v1352 = vadd.f32 %v1235, %v1351
      %v1353 = vpop.f32.mrb[0].mxu0
      %1354 = vmatprep.mubr.bf16.mxu0 0
      %1355 = vmatmul.mubr.bf16.gmra.mrb[0].mxu0 %v1260
      %v1356 = vpop.f32.mrb[0].mxu0
      %v1357 = vadd.f32 %v1235, %v1356
      %v1358 = vpop.f32.mrb[0].mxu0
      %v1359 = vpop.f32.mrb[0].mxu0
      %v1360 = vadd.f32 %v1235, %v1359
      %v1361 = vpop.f32.mrb[0].mxu0
      %1362 = vmatprep.mubr.bf16.mxu0 0
      %1363 = vmatmul.mubr.bf16.gmra.mrb[0].mxu0 %v1263
      %v1364 = vpop.f32.mrb[0].mxu0
      %v1365 = vadd.f32 %v1235, %v1364
      %v1366 = vpop.f32.mrb[0].mxu0
      %v1367 = vpop.f32.mrb[0].mxu0
      %v1368 = vadd.f32 %v1235, %v1367
      %v1369 = vpop.f32.mrb[0].mxu0
      %1370 = vmatprep.mubr.bf16.mxu0 0
      %1371 = vmatmul.mubr.bf16.gmra.mrb[0].mxu0 %v1266
      %v1372 = vpop.f32.mrb[0].mxu0
      %v1373 = vadd.f32 %v1235, %v1372
      %v1374 = vpop.f32.mrb[0].mxu0
      %v1375 = vpop.f32.mrb[0].mxu0
      %v1376 = vadd.f32 %v1235, %v1375
      %v1377 = vpop.f32.mrb[0].mxu0
      %1378 = vmatprep.mubr.bf16.mxu0 0
      %1379 = vmatmul.mubr.bf16.gmra.mrb[0].mxu0 %v1269
      %v1380 = vpop.f32.mrb[0].mxu0
      %v1381 = vadd.f32 %v1235, %v1380
      %v1382 = vpop.f32.mrb[0].mxu0
      %v1383 = vpop.f32.mrb[0].mxu0
      %v1384 = vadd.f32 %v1235, %v1383
      %v1385 = vpop.f32.mrb[0].mxu0
      %1386 = vmatprep.mubr.bf16.mxu0 0
      %1387 = vmatmul.mubr.bf16.gmra.mrb[0].mxu0 %v1272
      %v1388 = vpop.f32.mrb[0].mxu0
      %v1389 = vadd.f32 %v1235, %v1388
      %v1390 = vpop.f32.mrb[0].mxu0
      %v1391 = vpop.f32.mrb[0].mxu0
      %v1392 = vadd.f32 %v1235, %v1391
      %v1393 = vpop.f32.mrb[0].mxu0
      %1394 = vmatprep.mubr.bf16.mxu0 0
      %1395 = vmatmul.mubr.bf16.gmra.mrb[0].mxu0 %v1275
      %v1396 = vpop.f32.mrb[0].mxu0
      %v1397 = vadd.f32 %v1235, %v1396
      %v1398 = vpop.f32.mrb[0].mxu0
      %v1399 = vpop.f32.mrb[0].mxu0
      %v1400 = vadd.f32 %v1235, %v1399
      %v1401 = vpop.f32.mrb[0].mxu0
      %1402 = vmatprep.mubr.bf16.mxu0 0
      %1403 = vmatmul.mubr.bf16.gmra.mrb[0].mxu0 %v1278
      %v1404 = vpop.f32.mrb[0].mxu0
      %v1405 = vadd.f32 %v1235, %v1404
      %v1406 = vpop.f32.mrb[0].mxu0
      %v1407 = vpop.f32.mrb[0].mxu0
      %v1408 = vadd.f32 %v1235, %v1407
      %v1409 = vpop.f32.mrb[0].mxu0
      %1410 = vmatprep.mubr.bf16.mxu0 0
      %1411 = vmatmul.mubr.bf16.gmra.mrb[0].mxu0 %v1281
      %v1412 = vpop.f32.mrb[0].mxu0
      %v1413 = vadd.f32 %v1235, %v1412
      %v1414 = vpop.f32.mrb[0].mxu0
      %v1415 = vpop.f32.mrb[0].mxu0
      %v1416 = vadd.f32 %v1235, %v1415
      %v1417 = vpop.f32.mrb[0].mxu0
      %1418 = vmatprep.mubr.bf16.mxu0 0
      %1419 = vmatmul.mubr.bf16.gmra.mrb[0].mxu0 %v1284
      %v1420 = vpop.f32.mrb[0].mxu0
      %v1421 = vadd.f32 %v1235, %v1420
      %v1422 = vpop.f32.mrb[0].mxu0
      %v1423 = vpop.f32.mrb[0].mxu0
      %v1424 = vadd.f32 %v1235, %v1423
      %v1425 = vpop.f32.mrb[0].mxu0
      %1426 = vmatprep.mubr.bf16.mxu0 0
      %1427 = vmatmul.mubr.bf16.gmra.mrb[0].mxu0 %v1287
      %v1428 = vpop.f32.mrb[0].mxu0
      %v1429 = vadd.f32 %v1235, %v1428
      %v1430 = vpop.f32.mrb[0].mxu0
      %v1431 = vpop.f32.mrb[0].mxu0
      %v1432 = vadd.f32 %v1235, %v1431
      %v1433 = vpop.f32.mrb[0].mxu0
      %1434 = vmatprep.mubr.bf16.mxu0 0
      %1435 = vmatmul.mubr.bf16.gmra.mrb[0].mxu0 %v1290
      %v1436 = vpop.f32.mrb[0].mxu0
      %v1437 = vadd.f32 %v1235, %v1436
      %v1438 = vpop.f32.mrb[0].mxu0
      %v1439 = vpop.f32.mrb[0].mxu0
      %v1440 = vadd.f32 %v1235, %v1439
      %v1441 = vpop.f32.mrb[0].mxu0
      %1442 = vmatprep.mubr.bf16.mxu0 0
      %1443 = vmatmul.mubr.bf16.gmra.mrb[0].mxu0 %v1293
      %v1444 = vpop.f32.mrb[0].mxu0
      %v1445 = vadd.f32 %v1235, %v1444
      %v1446 = vpop.f32.mrb[0].mxu0
      %v1447 = vpop.f32.mrb[0].mxu0
      %v1448 = vadd.f32 %v1235, %v1447
      %v1449 = vpop.f32.mrb[0].mxu0
      %1450 = vmatprep.mubr.bf16.mxu0 0
      %1451 = vmatmul.mubr.bf16.gmra.mrb[0].mxu0 %v1296
      %v1452 = vpop.f32.mrb[0].mxu0
      %v1453 = vadd.f32 %v1235, %v1452
      %v1454 = vpop.f32.mrb[0].mxu0
      %v1455 = vpop.f32.mrb[0].mxu0
      %v1456 = vadd.f32 %v1235, %v1455
      %v1457 = vpop.f32.mrb[0].mxu0
      %1458 = vdwg.mxu0
      %v1459 = vmax.f32 %v1333, 0.0
      %v1460 = vmax.f32 %v1336, 0.0
      %v1461 = vmax.f32 %v1341, 0.0
      %v1462 = vmax.f32 %v1344, 0.0
      %v1463 = vmax.f32 %v1349, 0.0
      %v1464 = vmax.f32 %v1352, 0.0
      %v1465 = vmax.f32 %v1357, 0.0
      %v1466 = vmax.f32 %v1360, 0.0
      %v1467 = vmax.f32 %v1365, 0.0
      %v1468 = vmax.f32 %v1368, 0.0
      %v1469 = vmax.f32 %v1373, 0.0
      %v1470 = vmax.f32 %v1376, 0.0
      %v1471 = vmax.f32 %v1381, 0.0
      %v1472 = vmax.f32 %v1384, 0.0
      %v1473 = vmax.f32 %v1389, 0.0
      %v1474 = vmax.f32 %v1392, 0.0
      %v1475 = vmax.f32 %v1397, 0.0
      %v1476 = vmax.f32 %v1400, 0.0
      %v1477 = vmax.f32 %v1405, 0.0
      %v1478 = vmax.f32 %v1408, 0.0
      %v1479 = vmax.f32 %v1413, 0.0
      %v1480 = vmax.f32 %v1416, 0.0
      %v1481 = vmax.f32 %v1421, 0.0
      %v1482 = vmax.f32 %v1424, 0.0
      %v1483 = vmax.f32 %v1429, 0.0
      %v1484 = vmax.f32 %v1432, 0.0
      %v1485 = vmax.f32 %v1437, 0.0
      %v1486 = vmax.f32 %v1440, 0.0
      %v1487 = vmax.f32 %v1445, 0.0
      %v1488 = vmax.f32 %v1448, 0.0
      %v1489 = vmax.f32 %v1453, 0.0
      %v1490 = vmax.f32 %v1456, 0.0
      %v1491 = vpack.c.bf16 %v1460, %v1459
      %v1492 = vpack.c.bf16 %v1462, %v1461
      %v1493 = vpack.c.bf16 %v1464, %v1463
      %v1494 = vpack.c.bf16 %v1466, %v1465
      %v1495 = vpack.c.bf16 %v1468, %v1467
      %v1496 = vpack.c.bf16 %v1470, %v1469
      %v1497 = vpack.c.bf16 %v1472, %v1471
      %v1498 = vpack.c.bf16 %v1474, %v1473
      %v1499 = vpack.c.bf16 %v1476, %v1475
      %v1500 = vpack.c.bf16 %v1478, %v1477
      %v1501 = vpack.c.bf16 %v1480, %v1479
      %v1502 = vpack.c.bf16 %v1482, %v1481
      %v1503 = vpack.c.bf16 %v1484, %v1483
      %v1504 = vpack.c.bf16 %v1486, %v1485
      %v1505 = vpack.c.bf16 %v1488, %v1487
      %v1506 = vpack.c.bf16 %v1490, %v1489
      %v1507 = vld [vmem:[%s7] sm:$0xf]
      %v1508 = vld [vmem:[%s7 + $0x4] sm:$0xf]
      %v1509 = vld [vmem:[%s8] sm:$0x1]
      %v1511 = vlaneseq
      %v1512 = vshrl.u32 %v1511, 7
      %v1513 = vsub.s32 0, %v1512
      %v1514 = vrot.slane %v1509, %v1513
      %v1518 = vunpack.c.l.b16 %v1507
      %v1519 = vunpack.c.l.b16 %v1508
      %v1520 = vpack.c.b16 %v1519, %v1518
      %vm1522 = vcmask 130048
      %v1524 = vsel %vm1522, %v1491, 0
      %v1527 = vsel %vm1522, %v1492, 0
      %v1530 = vsel %vm1522, %v1493, 0
      %v1533 = vsel %vm1522, %v1494, 0
      %v1536 = vsel %vm1522, %v1495, 0
      %v1539 = vsel %vm1522, %v1496, 0
      %v1542 = vsel %vm1522, %v1497, 0
      %v1545 = vsel %vm1522, %v1498, 0
      %v1548 = vsel %vm1522, %v1499, 0
      %v1551 = vsel %vm1522, %v1500, 0
      %v1554 = vsel %vm1522, %v1501, 0
      %v1557 = vsel %vm1522, %v1502, 0
      %v1560 = vsel %vm1522, %v1503, 0
      %v1563 = vsel %vm1522, %v1504, 0
      %v1566 = vsel %vm1522, %v1505, 0
      %v1569 = vsel %vm1522, %v1506, 0
      %1571 = vmatprep.subr.bf16.mxu0 0
      %1572 = vmatpush1.bf16.msra.mxu0 %v1520
      %1573 = vmatprep.subr.bf16.mxu0 0
      %1574 = vmatpush1.bf16.msra.mxu0 0
      %1575 = vmatprep.subr.bf16.mxu0 0
      %1576 = vmatpush1.bf16.msra.mxu0 0
      %1577 = vmatprep.subr.bf16.mxu0 0
      %1578 = vmatpush1.bf16.msra.mxu0 0
      %1579 = vmatprep.subr.bf16.mxu0 0
      %1580 = vmatpush1.bf16.msra.mxu0 0
      %1581 = vmatprep.subr.bf16.mxu0 0
      %1582 = vmatpush1.bf16.msra.mxu0 0
      %1583 = vmatprep.subr.bf16.mxu0 0
      %1584 = vmatpush1.bf16.msra.mxu0 0
      %1585 = vmatprep.subr.bf16.mxu0 0
      %1586 = vmatpush1.bf16.msra.mxu0 0
      %1587 = vmatprep.subr.bf16.mxu0 0
      %1588 = vmatpush1.bf16.msra.mxu0 0
      %1589 = vmatprep.subr.bf16.mxu0 0
      %1590 = vmatpush1.bf16.msra.mxu0 0
      %1591 = vmatprep.subr.bf16.mxu0 0
      %1592 = vmatpush1.bf16.msra.mxu0 0
      %1593 = vmatprep.subr.bf16.mxu0 0
      %1594 = vmatpush1.bf16.msra.mxu0 0
      %1595 = vmatprep.subr.bf16.mxu0 0
      %1596 = vmatpush1.bf16.msra.mxu0 0
      %1597 = vmatprep.subr.bf16.mxu0 0
      %1598 = vmatpush1.bf16.msra.mxu0 0
      %1599 = vmatprep.subr.bf16.mxu0 0
      %1600 = vmatpush1.bf16.msra.mxu0 0
      %1601 = vmatprep.subr.bf16.mxu0 0
      %1602 = vmatpush1.bf16.msra.mxu0 0
      %1603 = vmatprep.mubr.bf16.mxu0 0
      %1604 = vmatmul.mubr.bf16.gmra.mrb[0].mxu0 %v1524
      %v1605 = vpop.f32.mrb[0].mxu0
      %v1606 = vadd.f32 %v1514, %v1605
      %v1607 = vpop.f32.mrb[0].mxu0
      %v1608 = vpop.f32.mrb[0].mxu0
      %v1609 = vadd.f32 %v1514, %v1608
      %v1610 = vpop.f32.mrb[0].mxu0
      %1611 = vmatprep.mubr.bf16.mxu0 0
      %1612 = vmatmul.mubr.bf16.gmra.mrb[0].mxu0 %v1527
      %v1613 = vpop.f32.mrb[0].mxu0
      %v1614 = vadd.f32 %v1514, %v1613
      %v1615 = vpop.f32.mrb[0].mxu0
      %v1616 = vpop.f32.mrb[0].mxu0
      %v1617 = vadd.f32 %v1514, %v1616
      %v1618 = vpop.f32.mrb[0].mxu0
      %1619 = vmatprep.mubr.bf16.mxu0 0
      %1620 = vmatmul.mubr.bf16.gmra.mrb[0].mxu0 %v1530
      %v1621 = vpop.f32.mrb[0].mxu0
      %v1622 = vadd.f32 %v1514, %v1621
      %v1623 = vpop.f32.mrb[0].mxu0
      %v1624 = vpop.f32.mrb[0].mxu0
      %v1625 = vadd.f32 %v1514, %v1624
      %v1626 = vpop.f32.mrb[0].mxu0
      %1627 = vmatprep.mubr.bf16.mxu0 0
      %1628 = vmatmul.mubr.bf16.gmra.mrb[0].mxu0 %v1533
      %v1629 = vpop.f32.mrb[0].mxu0
      %v1630 = vadd.f32 %v1514, %v1629
      %v1631 = vpop.f32.mrb[0].mxu0
      %v1632 = vpop.f32.mrb[0].mxu0
      %v1633 = vadd.f32 %v1514, %v1632
      %v1634 = vpop.f32.mrb[0].mxu0
      %1635 = vmatprep.mubr.bf16.mxu0 0
      %1636 = vmatmul.mubr.bf16.gmra.mrb[0].mxu0 %v1536
      %v1637 = vpop.f32.mrb[0].mxu0
      %v1638 = vadd.f32 %v1514, %v1637
      %v1639 = vpop.f32.mrb[0].mxu0
      %v1640 = vpop.f32.mrb[0].mxu0
      %v1641 = vadd.f32 %v1514, %v1640
      %v1642 = vpop.f32.mrb[0].mxu0
      %1643 = vmatprep.mubr.bf16.mxu0 0
      %1644 = vmatmul.mubr.bf16.gmra.mrb[0].mxu0 %v1539
      %v1645 = vpop.f32.mrb[0].mxu0
      %v1646 = vadd.f32 %v1514, %v1645
      %v1647 = vpop.f32.mrb[0].mxu0
      %v1648 = vpop.f32.mrb[0].mxu0
      %v1649 = vadd.f32 %v1514, %v1648
      %v1650 = vpop.f32.mrb[0].mxu0
      %1651 = vmatprep.mubr.bf16.mxu0 0
      %1652 = vmatmul.mubr.bf16.gmra.mrb[0].mxu0 %v1542
      %v1653 = vpop.f32.mrb[0].mxu0
      %v1654 = vadd.f32 %v1514, %v1653
      %v1655 = vpop.f32.mrb[0].mxu0
      %v1656 = vpop.f32.mrb[0].mxu0
      %v1657 = vadd.f32 %v1514, %v1656
      %v1658 = vpop.f32.mrb[0].mxu0
      %1659 = vmatprep.mubr.bf16.mxu0 0
      %1660 = vmatmul.mubr.bf16.gmra.mrb[0].mxu0 %v1545
      %v1661 = vpop.f32.mrb[0].mxu0
      %v1662 = vadd.f32 %v1514, %v1661
      %v1663 = vpop.f32.mrb[0].mxu0
      %v1664 = vpop.f32.mrb[0].mxu0
      %v1665 = vadd.f32 %v1514, %v1664
      %v1666 = vpop.f32.mrb[0].mxu0
      %1667 = vmatprep.mubr.bf16.mxu0 0
      %1668 = vmatmul.mubr.bf16.gmra.mrb[0].mxu0 %v1548
      %v1669 = vpop.f32.mrb[0].mxu0
      %v1670 = vadd.f32 %v1514, %v1669
      %v1671 = vpop.f32.mrb[0].mxu0
      %v1672 = vpop.f32.mrb[0].mxu0
      %v1673 = vadd.f32 %v1514, %v1672
      %v1674 = vpop.f32.mrb[0].mxu0
      %1675 = vmatprep.mubr.bf16.mxu0 0
      %1676 = vmatmul.mubr.bf16.gmra.mrb[0].mxu0 %v1551
      %v1677 = vpop.f32.mrb[0].mxu0
      %v1678 = vadd.f32 %v1514, %v1677
      %v1679 = vpop.f32.mrb[0].mxu0
      %v1680 = vpop.f32.mrb[0].mxu0
      %v1681 = vadd.f32 %v1514, %v1680
      %v1682 = vpop.f32.mrb[0].mxu0
      %1683 = vmatprep.mubr.bf16.mxu0 0
      %1684 = vmatmul.mubr.bf16.gmra.mrb[0].mxu0 %v1554
      %v1685 = vpop.f32.mrb[0].mxu0
      %v1686 = vadd.f32 %v1514, %v1685
      %v1687 = vpop.f32.mrb[0].mxu0
      %v1688 = vpop.f32.mrb[0].mxu0
      %v1689 = vadd.f32 %v1514, %v1688
      %v1690 = vpop.f32.mrb[0].mxu0
      %1691 = vmatprep.mubr.bf16.mxu0 0
      %1692 = vmatmul.mubr.bf16.gmra.mrb[0].mxu0 %v1557
      %v1693 = vpop.f32.mrb[0].mxu0
      %v1694 = vadd.f32 %v1514, %v1693
      %v1695 = vpop.f32.mrb[0].mxu0
      %v1696 = vpop.f32.mrb[0].mxu0
      %v1697 = vadd.f32 %v1514, %v1696
      %v1698 = vpop.f32.mrb[0].mxu0
      %1699 = vmatprep.mubr.bf16.mxu0 0
      %1700 = vmatmul.mubr.bf16.gmra.mrb[0].mxu0 %v1560
      %v1701 = vpop.f32.mrb[0].mxu0
      %v1702 = vadd.f32 %v1514, %v1701
      %v1703 = vpop.f32.mrb[0].mxu0
      %v1704 = vpop.f32.mrb[0].mxu0
      %v1705 = vadd.f32 %v1514, %v1704
      %v1706 = vpop.f32.mrb[0].mxu0
      %1707 = vmatprep.mubr.bf16.mxu0 0
      %1708 = vmatmul.mubr.bf16.gmra.mrb[0].mxu0 %v1563
      %v1709 = vpop.f32.mrb[0].mxu0
      %v1710 = vadd.f32 %v1514, %v1709
      %v1711 = vpop.f32.mrb[0].mxu0
      %v1712 = vpop.f32.mrb[0].mxu0
      %v1713 = vadd.f32 %v1514, %v1712
      %v1714 = vpop.f32.mrb[0].mxu0
      %1715 = vmatprep.mubr.bf16.mxu0 0
      %1716 = vmatmul.mubr.bf16.gmra.mrb[0].mxu0 %v1566
      %v1717 = vpop.f32.mrb[0].mxu0
      %v1718 = vadd.f32 %v1514, %v1717
      %v1719 = vpop.f32.mrb[0].mxu0
      %v1720 = vpop.f32.mrb[0].mxu0
      %v1721 = vadd.f32 %v1514, %v1720
      %v1722 = vpop.f32.mrb[0].mxu0
      %1723 = vmatprep.mubr.bf16.mxu0 0
      %1724 = vmatmul.mubr.bf16.gmra.mrb[0].mxu0 %v1569
      %v1725 = vpop.f32.mrb[0].mxu0
      %v1726 = vadd.f32 %v1514, %v1725
      %v1727 = vpop.f32.mrb[0].mxu0
      %v1728 = vpop.f32.mrb[0].mxu0
      %v1729 = vadd.f32 %v1514, %v1728
      %v1730 = vpop.f32.mrb[0].mxu0
      %1731 = vdwg.mxu0
      %v1732 = vmax.f32 %v1606, 0.0
      %v1733 = vmax.f32 %v1609, 0.0
      %v1734 = vmax.f32 %v1614, 0.0
      %v1735 = vmax.f32 %v1617, 0.0
      %v1736 = vmax.f32 %v1622, 0.0
      %v1737 = vmax.f32 %v1625, 0.0
      %v1738 = vmax.f32 %v1630, 0.0
      %v1739 = vmax.f32 %v1633, 0.0
      %v1740 = vmax.f32 %v1638, 0.0
      %v1741 = vmax.f32 %v1641, 0.0
      %v1742 = vmax.f32 %v1646, 0.0
      %v1743 = vmax.f32 %v1649, 0.0
      %v1744 = vmax.f32 %v1654, 0.0
      %v1745 = vmax.f32 %v1657, 0.0
      %v1746 = vmax.f32 %v1662, 0.0
      %v1747 = vmax.f32 %v1665, 0.0
      %v1748 = vmax.f32 %v1670, 0.0
      %v1749 = vmax.f32 %v1673, 0.0
      %v1750 = vmax.f32 %v1678, 0.0
      %v1751 = vmax.f32 %v1681, 0.0
      %v1752 = vmax.f32 %v1686, 0.0
      %v1753 = vmax.f32 %v1689, 0.0
      %v1754 = vmax.f32 %v1694, 0.0
      %v1755 = vmax.f32 %v1697, 0.0
      %v1756 = vmax.f32 %v1702, 0.0
      %v1757 = vmax.f32 %v1705, 0.0
      %v1758 = vmax.f32 %v1710, 0.0
      %v1759 = vmax.f32 %v1713, 0.0
      %v1760 = vmax.f32 %v1718, 0.0
      %v1761 = vmax.f32 %v1721, 0.0
      %v1762 = vmax.f32 %v1726, 0.0
      %v1763 = vmax.f32 %v1729, 0.0
      %v1764 = vld [vmem:[%s2] sm:$0xff]
      %v1765 = vld [vmem:[%s2 + $0x8] sm:$0xff]
      %v1766 = vpack.c.bf16 %v1733, %v1732
      %v1767 = vpack.c.bf16 %v1735, %v1734
      %v1768 = vpack.c.bf16 %v1737, %v1736
      %v1769 = vpack.c.bf16 %v1739, %v1738
      %v1770 = vpack.c.bf16 %v1741, %v1740
      %v1771 = vpack.c.bf16 %v1743, %v1742
      %v1772 = vpack.c.bf16 %v1745, %v1744
      %v1773 = vpack.c.bf16 %v1747, %v1746
      %v1774 = vpack.c.bf16 %v1749, %v1748
      %v1775 = vpack.c.bf16 %v1751, %v1750
      %v1776 = vpack.c.bf16 %v1753, %v1752
      %v1777 = vpack.c.bf16 %v1755, %v1754
      %v1778 = vpack.c.bf16 %v1757, %v1756
      %v1779 = vpack.c.bf16 %v1759, %v1758
      %v1780 = vpack.c.bf16 %v1761, %v1760
      %v1781 = vpack.c.bf16 %v1763, %v1762
      %v1784 = vunpack.c.l.b16 %v1764
      %v1785 = vunpack.c.h.b16 %v1764
      %v1786 = vunpack.c.l.b16 %v1765
      %v1787 = vunpack.c.h.b16 %v1765
      %v1788 = vpack.c.b16 %v1786, %v1784
      %v1789 = vpack.c.b16 %v1787, %v1785
      %1792 = vmatprep.subr.bf16.mxu0 0
      %1793 = vmatpush1.bf16.msra.mxu0 %v1766
      %1794 = vmatprep.subr.bf16.mxu0 0
      %1795 = vmatpush1.bf16.msra.mxu0 %v1767
      %1796 = vmatprep.subr.bf16.mxu0 0
      %1797 = vmatpush1.bf16.msra.mxu0 %v1768
      %1798 = vmatprep.subr.bf16.mxu0 0
      %1799 = vmatpush1.bf16.msra.mxu0 %v1769
      %1800 = vmatprep.subr.bf16.mxu0 0
      %1801 = vmatpush1.bf16.msra.mxu0 %v1770
      %1802 = vmatprep.subr.bf16.mxu0 0
      %1803 = vmatpush1.bf16.msra.mxu0 %v1771
      %1804 = vmatprep.subr.bf16.mxu0 0
      %1805 = vmatpush1.bf16.msra.mxu0 %v1772
      %1806 = vmatprep.subr.bf16.mxu0 0
      %1807 = vmatpush1.bf16.msra.mxu0 %v1773
      %1808 = vmatprep.subr.bf16.mxu0 0
      %1809 = vmatpush1.bf16.msra.mxu0 %v1774
      %1810 = vmatprep.subr.bf16.mxu0 0
      %1811 = vmatpush1.bf16.msra.mxu0 %v1775
      %1812 = vmatprep.subr.bf16.mxu0 0
      %1813 = vmatpush1.bf16.msra.mxu0 %v1776
      %1814 = vmatprep.subr.bf16.mxu0 0
      %1815 = vmatpush1.bf16.msra.mxu0 %v1777
      %1816 = vmatprep.subr.bf16.mxu0 0
      %1817 = vmatpush1.bf16.msra.mxu0 %v1778
      %1818 = vmatprep.subr.bf16.mxu0 0
      %1819 = vmatpush1.bf16.msra.mxu0 %v1779
      %1820 = vmatprep.subr.bf16.mxu0 0
      %1821 = vmatpush1.bf16.msra.mxu0 %v1780
      %1822 = vmatprep.subr.bf16.mxu0 0
      %1823 = vmatpush1.bf16.msra.mxu0 %v1781
      %1824 = vmatprep.mubr.bf16.mxu0 %v1789
      %1825 = vmatmul.mubr.bf16.gmra.mrb[0].mxu0 %v1788
      %v1826 = vpop.f32.mrb[0].mxu0
      %v1827 = vadd.f32 0.0, %v1826
      %v1828 = vpop.f32.mrb[0].mxu0
      %v1829 = vpop.f32.mrb[0].mxu0
      %v1830 = vadd.f32 0.0, %v1829
      %v1831 = vpop.f32.mrb[0].mxu0
      %1832 = vdwg.mxu0
      %v1833 = vpack.c.bf16 %v1830, %v1827
      %v1834 = vld [vmem:[%s9] sm:$0xf]
      %v1835 = vld [vmem:[%s10] sm:$0x1]
      %v1837 = vlaneseq
      %v1838 = vshrl.u32 %v1837, 7
      %v1839 = vsub.s32 0, %v1838
      %v1840 = vrot.slane %v1835, %v1839
      %v1843 = vsel %vm836, %v1833, 0
      %v1846 = vsel %vm885, %v1834, 0
      %1848 = vmatprep.subr.bf16.mxu0 0
      %1849 = vmatpush1.bf16.msra.mxu0 %v1846
      %1850 = vmatprep.subr.bf16.mxu0 0
      %1851 = vmatpush1.bf16.msra.mxu0 0
      %1852 = vmatprep.subr.bf16.mxu0 0
      %1853 = vmatpush1.bf16.msra.mxu0 0
      %1854 = vmatprep.subr.bf16.mxu0 0
      %1855 = vmatpush1.bf16.msra.mxu0 0
      %1856 = vmatprep.subr.bf16.mxu0 0
      %1857 = vmatpush1.bf16.msra.mxu0 0
      %1858 = vmatprep.subr.bf16.mxu0 0
      %1859 = vmatpush1.bf16.msra.mxu0 0
      %1860 = vmatprep.subr.bf16.mxu0 0
      %1861 = vmatpush1.bf16.msra.mxu0 0
      %1862 = vmatprep.subr.bf16.mxu0 0
      %1863 = vmatpush1.bf16.msra.mxu0 0
      %1864 = vmatprep.subr.bf16.mxu0 0
      %1865 = vmatpush1.bf16.msra.mxu0 0
      %1866 = vmatprep.subr.bf16.mxu0 0
      %1867 = vmatpush1.bf16.msra.mxu0 0
      %1868 = vmatprep.subr.bf16.mxu0 0
      %1869 = vmatpush1.bf16.msra.mxu0 0
      %1870 = vmatprep.subr.bf16.mxu0 0
      %1871 = vmatpush1.bf16.msra.mxu0 0
      %1872 = vmatprep.subr.bf16.mxu0 0
      %1873 = vmatpush1.bf16.msra.mxu0 0
      %1874 = vmatprep.subr.bf16.mxu0 0
      %1875 = vmatpush1.bf16.msra.mxu0 0
      %1876 = vmatprep.subr.bf16.mxu0 0
      %1877 = vmatpush1.bf16.msra.mxu0 0
      %1878 = vmatprep.subr.bf16.mxu0 0
      %1879 = vmatpush1.bf16.msra.mxu0 0
      %1880 = vmatprep.mubr.bf16.mxu0 0
      %1881 = vmatmul.mubr.bf16.gmra.mrb[0].mxu0 %v1843
      %v1882 = vpop.f32.mrb[0].mxu0
      %v1883 = vadd.f32 %v1840, %v1882
      %v1884 = vpop.f32.mrb[0].mxu0
      %v1885 = vpop.f32.mrb[0].mxu0
      %v1886 = vadd.f32 %v1840, %v1885
      %v1887 = vpop.f32.mrb[0].mxu0
      %1888 = vdwg.mxu0
      %1889 = vst [vmem:[%s408] sm:$0xff] %v1883
      %1890 = vst [vmem:[%s408 + $0x8] sm:$0xff] %v1886
      %s1891 = smul.u32 2, %s22
      %p1892 = scmp.lt.s32.totalorder %s1891, 3
      %s1893 = scalar_select %p1892, %s1891, 3
      %s1894 = smul.addr %s1893, 8
      %s1895 = scalar_lea.vmem %s11, %s1894
      // Predicated region
      $region65: #{gcn_forward.1} parent=63 // pred_check
        %p1896 = pneg %p281
      $region66: #{gcn_forward.1} parent=63 // pred_check_branch
        %1898 = sbr.rel (%p1896) target = $region68
      $region67: #{gcn_forward.1} parent=63 // pred_region
        %s1899 = smul.u32 2, %s22
      $region68: #{gcn_forward.1} parent=63 // pred_fallthru
        _
    $region64: #{gcn_forward.1} parent=5 // pred_fallthru
      _
    %p1900 = scmp.le.s32.totalorder 2, %s17
    // Predicated region
    $region69: #{gcn_forward.1} parent=5 // pred_check
      %p1901 = pneg %p1900
    $region70: #{gcn_forward.1} parent=5 // pred_check_branch
      %1903 = sbr.rel (%p1901) target = $region72
    $region71: #{gcn_forward.1} parent=5 // pred_region
      %s1904 = ssub.s32 %s17, 2
      // Predicated region
      $region73: #{gcn_forward.1} parent=71 // pred_check
        %p1905 = pneg %p287
      $region74: #{gcn_forward.1} parent=71 // pred_check_branch
        %1907 = sbr.rel (%p1905) target = $region76
      $region75: #{gcn_forward.1} parent=71 // pred_region
        %s1908 = smul.u32 2, %s23
        %p1909 = scmp.lt.s32.totalorder %s1908, 3
        %s1910 = scalar_select %p1909, %s1908, 3
        %s1911 = smul.addr %s1910, 8
        %s1912 = scalar_lea.vmem %s11, %s1911
      $region76: #{gcn_forward.1} parent=71 // pred_fallthru
        _
    $region72: #{gcn_forward.1} parent=5 // pred_fallthru
      _
  $region6: #{gcn_forward.1} parent=0 // loop_footer
    %s21 = sadd.s32 1, %s17
  $region7: #{gcn_forward.1} parent=0 // loop_footer_branch
    %16 = sbr.rel target = $region3
  $region8: #{gcn_forward.1} parent=0 // loop_exit
    _

</llo_original>
